<compile_context>
chip_gen: v7x
topology: tpu7x:2x2x1
jax: 0.10.0
libtpu: 0.0.40
codegen_flags: <defaults>
</compile_context>

<pallas_src>
import jax
import jax.numpy as jnp
from jax.experimental import pallas as pl
from jax.experimental.pallas import tpu as pltpu

LANE = 128


def music_encoder_kernel(s_idx_ref, g_idx_ref,              # scalar-prefetch (SMEM, int32[B])
                         feat_ref, gamma_ref, beta_ref,      # VMEM: [B,F], [1,F], [1,F]
                         wff_ref, bfold_ref,                 # VMEM: [F,128], [1,128]
                         s_tab_hbm, g_tab_hbm,               # HBM (pl.ANY): [417,128], [18,128]
                         out_ref,                            # VMEM out: [B,128]
                         s_stage, g_stage, sem):             # scratch: [B,128] x2, DMA sems (2,B)
    B = feat_ref.shape[0]
    n_s = s_tab_hbm.shape[0]
    n_g = g_tab_hbm.shape[0]

    # ---- fire all per-row embedding gathers first so the tiny row DMAs overlap the
    #      BatchNorm + matmul below (grid=(1,) gives no auto-pipelining to hide them) ----
    copies = []
    for i in range(B):                                       # B small & static -> unrolled
        si = jnp.clip(s_idx_ref[i], 0, n_s - 1)              # clamp: no silent OOB gather
        gi = jnp.clip(g_idx_ref[i], 0, n_g - 1)
        cs = pltpu.make_async_copy(s_tab_hbm.at[pl.ds(si, 1), :],
                                   s_stage.at[pl.ds(i, 1), :], sem.at[0, i])
        cg = pltpu.make_async_copy(g_tab_hbm.at[pl.ds(gi, 1), :],
                                   g_stage.at[pl.ds(i, 1), :], sem.at[1, i])
        cs.start()
        cg.start()
        copies.append((cs, cg))

    # ---- BatchNorm1d (training mode: batch stats, biased variance, eps=1e-5) ----
    x = feat_ref[...].astype(jnp.float32)                    # [B, F]
    mean = jnp.mean(x, axis=0, keepdims=True)                 # [1, F]
    var = jnp.mean((x - mean) ** 2, axis=0, keepdims=True)    # [1, F]
    scale = gamma_ref[...] * jax.lax.rsqrt(var + 1e-5)        # gamma folded into rsqrt (EUP)
    xn = (x - mean) * scale + beta_ref[...]                   # [B, F]

    # ---- single fused matmul: W_out already folded into the feature weight offline ----
    acc = jnp.dot(xn, wff_ref[...],
                  preferred_element_type=jnp.float32) + bfold_ref[...]   # [B, 128]

    # ---- wait on the gathered (pre-folded) rows and accumulate: lane-dense adds ----
    for cs, cg in copies:
        cs.wait()
        cg.wait()
    out_ref[...] = (acc + s_stage[...] + g_stage[...]).astype(out_ref.dtype)


def prepare_params(params):
    """One-time param prep: fold the output Linear through each of the three concat
    paths and lane-pad everything to 128 so the kernel is one tiny matmul plus
    lane-dense row adds. Fold is done at Precision.HIGHEST (correctness-review note)."""
    hp = jax.lax.Precision.HIGHEST
    E = params["E_singers"].shape[1]
    H2 = params["W_out"].shape[0]
    H2p = ((H2 + LANE - 1) // LANE) * LANE
    Wo = params["W_out"]                                      # [2H, 3E]
    Wo_f, Wo_s, Wo_g = Wo[:, :E], Wo[:, E:2 * E], Wo[:, 2 * E:]

    def pad_lanes(m):
        return jnp.zeros((m.shape[0], H2p), jnp.float32).at[:, :H2].set(m)

    wff = jnp.dot(params["W_feature"].T, Wo_f.T, precision=hp)                 # [F, 2H]
    b_fold = jnp.dot(params["b_feature"][None, :], Wo_f.T, precision=hp) \
        + params["b_out"][None, :]                                             # [1, 2H]
    s_out = jnp.dot(params["E_singers"], Wo_s.T, precision=hp)                 # [417, 2H]
    g_out = jnp.dot(params["E_genre"], Wo_g.T, precision=hp)                   # [18, 2H]
    return {
        "wff": pad_lanes(wff),            # [F, 128] folded feature weight (VMEM)
        "b_fold": pad_lanes(b_fold),      # [1, 128]
        "s_table": pad_lanes(s_out),      # [417, 128] folded singer table (stays in HBM)
        "g_table": pad_lanes(g_out),      # [18, 128]  folded genre  table (stays in HBM)
        "gamma": params["bn_gamma"].reshape(1, -1),           # [1, F]
        "beta": params["bn_beta"].reshape(1, -1),             # [1, F]
    }


def music_encoder_forward(feature, singer_idx, genre_idx, prep):
    """Returns the lane-padded [B, 128] output (lanes >= 2*hidden are zero).
    The consumer should fuse the [:, :2*hidden] slice; we avoid the extra XLA
    slice dispatch here (latency-bound regime)."""
    B = feature.shape[0]
    H2p = prep["wff"].shape[1]

    vmem = pl.BlockSpec(memory_space=pltpu.MemorySpace.VMEM)
    hbm = pl.BlockSpec(memory_space=pl.ANY)
    grid_spec = pltpu.PrefetchScalarGridSpec(
        num_scalar_prefetch=2,                                # singer / genre indices -> SMEM
        grid=(1,),
        in_specs=[vmem, vmem, vmem, vmem, vmem, hbm, hbm],
        out_specs=vmem,
        scratch_shapes=[
            pltpu.VMEM((B, H2p), jnp.float32),                # singer row staging
            pltpu.VMEM((B, H2p), jnp.float32),                # genre row staging
            pltpu.SemaphoreType.DMA((2, B)),                  # one sem per row DMA
        ],
    )
    return pl.pallas_call(
        music_encoder_kernel,
        out_shape=jax.ShapeDtypeStruct((B, H2p), jnp.float32),
        grid_spec=grid_spec,
        compiler_params=pltpu.CompilerParams(dimension_semantics=("arbitrary",)),
    )(
        singer_idx.reshape(-1).astype(jnp.int32),
        genre_idx.reshape(-1).astype(jnp.int32),
        feature,
        prep["gamma"], prep["beta"],
        prep["wff"], prep["b_fold"],
        prep["s_table"], prep["g_table"],
    )


def init_params(key, song_feature_len, emb_size, hidden):
    """Deterministic synthetic parameters matching the module's shapes."""
    ks = jax.random.split(key, 8)

    def xavier_uniform(k, shape):
        fan_out, fan_in = shape
        bound = jnp.sqrt(6.0 / (fan_in + fan_out))
        return jax.random.uniform(k, shape, jnp.float32, -bound, bound)

    def linear_init(kw, kb, out_dim, in_dim):
        bound = 1.0 / jnp.sqrt(in_dim)
        w = jax.random.uniform(kw, (out_dim, in_dim), jnp.float32, -bound, bound)
        b = jax.random.uniform(kb, (out_dim,), jnp.float32, -bound, bound)
        return w, b

    W_feature, b_feature = linear_init(ks[0], ks[1], emb_size, song_feature_len)
    W_out, b_out = linear_init(ks[2], ks[3], hidden * 2, emb_size * 3)
    E_singers = xavier_uniform(ks[4], (417, emb_size))
    E_genre = xavier_uniform(ks[5], (18, emb_size))
    bn_gamma = jnp.ones((song_feature_len,), jnp.float32)     # BatchNorm1d default init
    bn_beta = jnp.zeros((song_feature_len,), jnp.float32)
    return {
        "W_feature": W_feature, "b_feature": b_feature,
        "W_out": W_out, "b_out": b_out,
        "E_singers": E_singers, "E_genre": E_genre,
        "bn_gamma": bn_gamma, "bn_beta": bn_beta,
    }


def reference_forward(feature, singer_idx, genre_idx, params):
    """Pure-JAX reference mirroring the PyTorch forward (training-mode BN, un-folded)."""
    hp = jax.lax.Precision.HIGHEST
    x = feature
    mean = jnp.mean(x, axis=0, keepdims=True)
    var = jnp.mean((x - mean) ** 2, axis=0, keepdims=True)
    xn = (x - mean) / jnp.sqrt(var + 1e-5)
    xn = xn * params["bn_gamma"][None, :] + params["bn_beta"][None, :]
    f = jnp.dot(xn, params["W_feature"].T, precision=hp) + params["b_feature"]
    s = jnp.take(params["E_singers"], singer_idx.reshape(-1), axis=0)
    g = jnp.take(params["E_genre"], genre_idx.reshape(-1), axis=0)
    embs = jnp.concatenate([f, s, g], axis=1)
    return jnp.dot(embs, params["W_out"].T, precision=hp) + params["b_out"]


if __name__ == "__main__":
    # Small config consistent with the module:
    #   song_feature_len=16, emb_size=32, hidden_size=32, batch=8
    SONG_FEATURE_LEN, EMB_SIZE, HIDDEN, BATCH = 16, 32, 32, 8
    H2 = HIDDEN * 2

    key = jax.random.PRNGKey(0)
    k_param, k_feat, k_singer, k_genre = jax.random.split(key, 4)

    params = init_params(k_param, SONG_FEATURE_LEN, EMB_SIZE, HIDDEN)
    prep = prepare_params(params)                             # one-time fold + pad

    feature = jax.random.normal(k_feat, (BATCH, SONG_FEATURE_LEN), jnp.float32)
    singer_idx = jax.random.randint(k_singer, (BATCH, 1), 0, 417)   # like music['singer']
    genre_idx = jax.random.randint(k_genre, (BATCH, 1), 0, 18)      # like music['genre']

    fwd = jax.jit(music_encoder_forward)
    out_padded = fwd(feature, singer_idx, genre_idx, prep)
    out_padded = jax.block_until_ready(out_padded)

    # Slice only for the self-check; production consumers fuse this slice downstream.
    out = out_padded[:, :H2]
    ref = reference_forward(feature, singer_idx, genre_idx, params)
    assert out.shape == (BATCH, H2)
    assert jnp.allclose(out, ref, atol=1e-4, rtol=1e-4), "mismatch vs reference"

    print("KERNEL_OK")
</pallas_src>

<mosaic_0001>
module attributes {stable_mosaic.version = 11 : i64} {
  func.func @music_encoder_kernel(%arg0: i32, %arg1: memref<8xi32, #tpu.memory_space<smem>>, %arg2: memref<8xi32, #tpu.memory_space<smem>>, %arg3: memref<8x16xf32, #tpu.memory_space<vmem>>, %arg4: memref<1x16xf32, #tpu.memory_space<vmem>>, %arg5: memref<1x16xf32, #tpu.memory_space<vmem>>, %arg6: memref<16x128xf32, #tpu.memory_space<vmem>>, %arg7: memref<1x128xf32, #tpu.memory_space<vmem>>, %arg8: memref<417x128xf32, #tpu.memory_space<any>>, %arg9: memref<18x128xf32, #tpu.memory_space<any>>, %arg10: memref<8x128xf32, #tpu.memory_space<vmem>>, %arg11: memref<8x128xf32, #tpu.memory_space<vmem>>, %arg12: memref<8x128xf32, #tpu.memory_space<vmem>>, %arg13: memref<2x8x!tpu.dma_semaphore, #tpu.memory_space<semaphore_mem>>) attributes {dimension_semantics = [#tpu.dimension_semantics<arbitrary>], iteration_bounds = array<i64: 1>, scalar_prefetch = 2 : i64, scratch_operands = 3 : i64, tpu.core_type = #tpu.core_type<tc>, window_params = [{pipeline_mode = #tpu.pipeline_mode<synchronous>, transform_indices = @transform_0, window_bounds = array<i64: 8, 16>}, {pipeline_mode = #tpu.pipeline_mode<synchronous>, transform_indices = @transform_1, window_bounds = array<i64: 1, 16>}, {pipeline_mode = #tpu.pipeline_mode<synchronous>, transform_indices = @transform_2, window_bounds = array<i64: 1, 16>}, {pipeline_mode = #tpu.pipeline_mode<synchronous>, transform_indices = @transform_3, window_bounds = array<i64: 16, 128>}, {pipeline_mode = #tpu.pipeline_mode<synchronous>, transform_indices = @transform_4, window_bounds = array<i64: 1, 128>}, {}, {}, {pipeline_mode = #tpu.pipeline_mode<synchronous>, transform_indices = @transform_7, window_bounds = array<i64: 8, 128>}]} {
    %c0 = arith.constant 0 : index
    %0 = memref.load %arg1[%c0] : memref<8xi32, #tpu.memory_space<smem>>
    %c0_i32 = arith.constant 0 : i32
    %c416_i32 = arith.constant 416 : i32
    %1 = arith.maxsi %c0_i32, %0 : i32
    %2 = arith.minsi %c416_i32, %1 : i32
    %c0_0 = arith.constant 0 : index
    %3 = memref.load %arg2[%c0_0] : memref<8xi32, #tpu.memory_space<smem>>
    %c0_i32_1 = arith.constant 0 : i32
    %c17_i32 = arith.constant 17 : i32
    %4 = arith.maxsi %c0_i32_1, %3 : i32
    %5 = arith.minsi %c17_i32, %4 : i32
    %c0_i32_2 = arith.constant 0 : i32
    %c0_i32_3 = arith.constant 0 : i32
    %c0_i32_4 = arith.constant 0 : i32
    %6 = tpu.memref_slice %arg8[%2, %c0_i32_4] : memref<417x128xf32, #tpu.memory_space<any>> -> memref<1x128xf32, #tpu.memory_space<any>>
    %c0_i32_5 = arith.constant 0 : i32
    %c0_i32_6 = arith.constant 0 : i32
    %7 = tpu.memref_slice %arg11[%c0_i32_5, %c0_i32_6] : memref<8x128xf32, #tpu.memory_space<vmem>> -> memref<1x128xf32, #tpu.memory_space<vmem>>
    %8 = tpu.memref_slice %arg13[%c0_i32_2, %c0_i32_3] : memref<2x8x!tpu.dma_semaphore, #tpu.memory_space<semaphore_mem>> -> memref<1x1x!tpu.dma_semaphore, #tpu.memory_space<semaphore_mem>>
    %9 = tpu.memref_squeeze %8 : memref<1x1x!tpu.dma_semaphore, #tpu.memory_space<semaphore_mem>> -> memref<!tpu.dma_semaphore, #tpu.memory_space<semaphore_mem>>
    tpu.enqueue_dma source(%6 : memref<1x128xf32, #tpu.memory_space<any>>) target(%7 : memref<1x128xf32, #tpu.memory_space<vmem>>) target_semaphore(%9 : memref<!tpu.dma_semaphore, #tpu.memory_space<semaphore_mem>>)
    %c1_i32 = arith.constant 1 : i32
    %c0_i32_7 = arith.constant 0 : i32
    %c0_i32_8 = arith.constant 0 : i32
    %10 = tpu.memref_slice %arg9[%5, %c0_i32_8] : memref<18x128xf32, #tpu.memory_space<any>> -> memref<1x128xf32, #tpu.memory_space<any>>
    %c0_i32_9 = arith.constant 0 : i32
    %c0_i32_10 = arith.constant 0 : i32
    %11 = tpu.memref_slice %arg12[%c0_i32_9, %c0_i32_10] : memref<8x128xf32, #tpu.memory_space<vmem>> -> memref<1x128xf32, #tpu.memory_space<vmem>>
    %12 = tpu.memref_slice %arg13[%c1_i32, %c0_i32_7] : memref<2x8x!tpu.dma_semaphore, #tpu.memory_space<semaphore_mem>> -> memref<1x1x!tpu.dma_semaphore, #tpu.memory_space<semaphore_mem>>
    %13 = tpu.memref_squeeze %12 : memref<1x1x!tpu.dma_semaphore, #tpu.memory_space<semaphore_mem>> -> memref<!tpu.dma_semaphore, #tpu.memory_space<semaphore_mem>>
    tpu.enqueue_dma source(%10 : memref<1x128xf32, #tpu.memory_space<any>>) target(%11 : memref<1x128xf32, #tpu.memory_space<vmem>>) target_semaphore(%13 : memref<!tpu.dma_semaphore, #tpu.memory_space<semaphore_mem>>)
    %c1 = arith.constant 1 : index
    %14 = memref.load %arg1[%c1] : memref<8xi32, #tpu.memory_space<smem>>
    %c0_i32_11 = arith.constant 0 : i32
    %c416_i32_12 = arith.constant 416 : i32
    %15 = arith.maxsi %c0_i32_11, %14 : i32
    %16 = arith.minsi %c416_i32_12, %15 : i32
    %c1_13 = arith.constant 1 : index
    %17 = memref.load %arg2[%c1_13] : memref<8xi32, #tpu.memory_space<smem>>
    %c0_i32_14 = arith.constant 0 : i32
    %c17_i32_15 = arith.constant 17 : i32
    %18 = arith.maxsi %c0_i32_14, %17 : i32
    %19 = arith.minsi %c17_i32_15, %18 : i32
    %c0_i32_16 = arith.constant 0 : i32
    %c1_i32_17 = arith.constant 1 : i32
    %c0_i32_18 = arith.constant 0 : i32
    %20 = tpu.memref_slice %arg8[%16, %c0_i32_18] : memref<417x128xf32, #tpu.memory_space<any>> -> memref<1x128xf32, #tpu.memory_space<any>>
    %c1_i32_19 = arith.constant 1 : i32
    %c0_i32_20 = arith.constant 0 : i32
    %21 = tpu.memref_slice %arg11[%c1_i32_19, %c0_i32_20] : memref<8x128xf32, #tpu.memory_space<vmem>> -> memref<1x128xf32, #tpu.memory_space<vmem>>
    %22 = tpu.memref_slice %arg13[%c0_i32_16, %c1_i32_17] : memref<2x8x!tpu.dma_semaphore, #tpu.memory_space<semaphore_mem>> -> memref<1x1x!tpu.dma_semaphore, #tpu.memory_space<semaphore_mem>>
    %23 = tpu.memref_squeeze %22 : memref<1x1x!tpu.dma_semaphore, #tpu.memory_space<semaphore_mem>> -> memref<!tpu.dma_semaphore, #tpu.memory_space<semaphore_mem>>
    tpu.enqueue_dma source(%20 : memref<1x128xf32, #tpu.memory_space<any>>) target(%21 : memref<1x128xf32, #tpu.memory_space<vmem>>) target_semaphore(%23 : memref<!tpu.dma_semaphore, #tpu.memory_space<semaphore_mem>>)
    %c1_i32_21 = arith.constant 1 : i32
    %c1_i32_22 = arith.constant 1 : i32
    %c0_i32_23 = arith.constant 0 : i32
    %24 = tpu.memref_slice %arg9[%19, %c0_i32_23] : memref<18x128xf32, #tpu.memory_space<any>> -> memref<1x128xf32, #tpu.memory_space<any>>
    %c1_i32_24 = arith.constant 1 : i32
    %c0_i32_25 = arith.constant 0 : i32
    %25 = tpu.memref_slice %arg12[%c1_i32_24, %c0_i32_25] : memref<8x128xf32, #tpu.memory_space<vmem>> -> memref<1x128xf32, #tpu.memory_space<vmem>>
    %26 = tpu.memref_slice %arg13[%c1_i32_21, %c1_i32_22] : memref<2x8x!tpu.dma_semaphore, #tpu.memory_space<semaphore_mem>> -> memref<1x1x!tpu.dma_semaphore, #tpu.memory_space<semaphore_mem>>
    %27 = tpu.memref_squeeze %26 : memref<1x1x!tpu.dma_semaphore, #tpu.memory_space<semaphore_mem>> -> memref<!tpu.dma_semaphore, #tpu.memory_space<semaphore_mem>>
    tpu.enqueue_dma source(%24 : memref<1x128xf32, #tpu.memory_space<any>>) target(%25 : memref<1x128xf32, #tpu.memory_space<vmem>>) target_semaphore(%27 : memref<!tpu.dma_semaphore, #tpu.memory_space<semaphore_mem>>)
    %c2 = arith.constant 2 : index
    %28 = memref.load %arg1[%c2] : memref<8xi32, #tpu.memory_space<smem>>
    %c0_i32_26 = arith.constant 0 : i32
    %c416_i32_27 = arith.constant 416 : i32
    %29 = arith.maxsi %c0_i32_26, %28 : i32
    %30 = arith.minsi %c416_i32_27, %29 : i32
    %c2_28 = arith.constant 2 : index
    %31 = memref.load %arg2[%c2_28] : memref<8xi32, #tpu.memory_space<smem>>
    %c0_i32_29 = arith.constant 0 : i32
    %c17_i32_30 = arith.constant 17 : i32
    %32 = arith.maxsi %c0_i32_29, %31 : i32
    %33 = arith.minsi %c17_i32_30, %32 : i32
    %c0_i32_31 = arith.constant 0 : i32
    %c2_i32 = arith.constant 2 : i32
    %c0_i32_32 = arith.constant 0 : i32
    %34 = tpu.memref_slice %arg8[%30, %c0_i32_32] : memref<417x128xf32, #tpu.memory_space<any>> -> memref<1x128xf32, #tpu.memory_space<any>>
    %c2_i32_33 = arith.constant 2 : i32
    %c0_i32_34 = arith.constant 0 : i32
    %35 = tpu.memref_slice %arg11[%c2_i32_33, %c0_i32_34] : memref<8x128xf32, #tpu.memory_space<vmem>> -> memref<1x128xf32, #tpu.memory_space<vmem>>
    %36 = tpu.memref_slice %arg13[%c0_i32_31, %c2_i32] : memref<2x8x!tpu.dma_semaphore, #tpu.memory_space<semaphore_mem>> -> memref<1x1x!tpu.dma_semaphore, #tpu.memory_space<semaphore_mem>>
    %37 = tpu.memref_squeeze %36 : memref<1x1x!tpu.dma_semaphore, #tpu.memory_space<semaphore_mem>> -> memref<!tpu.dma_semaphore, #tpu.memory_space<semaphore_mem>>
    tpu.enqueue_dma source(%34 : memref<1x128xf32, #tpu.memory_space<any>>) target(%35 : memref<1x128xf32, #tpu.memory_space<vmem>>) target_semaphore(%37 : memref<!tpu.dma_semaphore, #tpu.memory_space<semaphore_mem>>)
    %c1_i32_35 = arith.constant 1 : i32
    %c2_i32_36 = arith.constant 2 : i32
    %c0_i32_37 = arith.constant 0 : i32
    %38 = tpu.memref_slice %arg9[%33, %c0_i32_37] : memref<18x128xf32, #tpu.memory_space<any>> -> memref<1x128xf32, #tpu.memory_space<any>>
    %c2_i32_38 = arith.constant 2 : i32
    %c0_i32_39 = arith.constant 0 : i32
    %39 = tpu.memref_slice %arg12[%c2_i32_38, %c0_i32_39] : memref<8x128xf32, #tpu.memory_space<vmem>> -> memref<1x128xf32, #tpu.memory_space<vmem>>
    %40 = tpu.memref_slice %arg13[%c1_i32_35, %c2_i32_36] : memref<2x8x!tpu.dma_semaphore, #tpu.memory_space<semaphore_mem>> -> memref<1x1x!tpu.dma_semaphore, #tpu.memory_space<semaphore_mem>>
    %41 = tpu.memref_squeeze %40 : memref<1x1x!tpu.dma_semaphore, #tpu.memory_space<semaphore_mem>> -> memref<!tpu.dma_semaphore, #tpu.memory_space<semaphore_mem>>
    tpu.enqueue_dma source(%38 : memref<1x128xf32, #tpu.memory_space<any>>) target(%39 : memref<1x128xf32, #tpu.memory_space<vmem>>) target_semaphore(%41 : memref<!tpu.dma_semaphore, #tpu.memory_space<semaphore_mem>>)
    %c3 = arith.constant 3 : index
    %42 = memref.load %arg1[%c3] : memref<8xi32, #tpu.memory_space<smem>>
    %c0_i32_40 = arith.constant 0 : i32
    %c416_i32_41 = arith.constant 416 : i32
    %43 = arith.maxsi %c0_i32_40, %42 : i32
    %44 = arith.minsi %c416_i32_41, %43 : i32
    %c3_42 = arith.constant 3 : index
    %45 = memref.load %arg2[%c3_42] : memref<8xi32, #tpu.memory_space<smem>>
    %c0_i32_43 = arith.constant 0 : i32
    %c17_i32_44 = arith.constant 17 : i32
    %46 = arith.maxsi %c0_i32_43, %45 : i32
    %47 = arith.minsi %c17_i32_44, %46 : i32
    %c0_i32_45 = arith.constant 0 : i32
    %c3_i32 = arith.constant 3 : i32
    %c0_i32_46 = arith.constant 0 : i32
    %48 = tpu.memref_slice %arg8[%44, %c0_i32_46] : memref<417x128xf32, #tpu.memory_space<any>> -> memref<1x128xf32, #tpu.memory_space<any>>
    %c3_i32_47 = arith.constant 3 : i32
    %c0_i32_48 = arith.constant 0 : i32
    %49 = tpu.memref_slice %arg11[%c3_i32_47, %c0_i32_48] : memref<8x128xf32, #tpu.memory_space<vmem>> -> memref<1x128xf32, #tpu.memory_space<vmem>>
    %50 = tpu.memref_slice %arg13[%c0_i32_45, %c3_i32] : memref<2x8x!tpu.dma_semaphore, #tpu.memory_space<semaphore_mem>> -> memref<1x1x!tpu.dma_semaphore, #tpu.memory_space<semaphore_mem>>
    %51 = tpu.memref_squeeze %50 : memref<1x1x!tpu.dma_semaphore, #tpu.memory_space<semaphore_mem>> -> memref<!tpu.dma_semaphore, #tpu.memory_space<semaphore_mem>>
    tpu.enqueue_dma source(%48 : memref<1x128xf32, #tpu.memory_space<any>>) target(%49 : memref<1x128xf32, #tpu.memory_space<vmem>>) target_semaphore(%51 : memref<!tpu.dma_semaphore, #tpu.memory_space<semaphore_mem>>)
    %c1_i32_49 = arith.constant 1 : i32
    %c3_i32_50 = arith.constant 3 : i32
    %c0_i32_51 = arith.constant 0 : i32
    %52 = tpu.memref_slice %arg9[%47, %c0_i32_51] : memref<18x128xf32, #tpu.memory_space<any>> -> memref<1x128xf32, #tpu.memory_space<any>>
    %c3_i32_52 = arith.constant 3 : i32
    %c0_i32_53 = arith.constant 0 : i32
    %53 = tpu.memref_slice %arg12[%c3_i32_52, %c0_i32_53] : memref<8x128xf32, #tpu.memory_space<vmem>> -> memref<1x128xf32, #tpu.memory_space<vmem>>
    %54 = tpu.memref_slice %arg13[%c1_i32_49, %c3_i32_50] : memref<2x8x!tpu.dma_semaphore, #tpu.memory_space<semaphore_mem>> -> memref<1x1x!tpu.dma_semaphore, #tpu.memory_space<semaphore_mem>>
    %55 = tpu.memref_squeeze %54 : memref<1x1x!tpu.dma_semaphore, #tpu.memory_space<semaphore_mem>> -> memref<!tpu.dma_semaphore, #tpu.memory_space<semaphore_mem>>
    tpu.enqueue_dma source(%52 : memref<1x128xf32, #tpu.memory_space<any>>) target(%53 : memref<1x128xf32, #tpu.memory_space<vmem>>) target_semaphore(%55 : memref<!tpu.dma_semaphore, #tpu.memory_space<semaphore_mem>>)
    %c4 = arith.constant 4 : index
    %56 = memref.load %arg1[%c4] : memref<8xi32, #tpu.memory_space<smem>>
    %c0_i32_54 = arith.constant 0 : i32
    %c416_i32_55 = arith.constant 416 : i32
    %57 = arith.maxsi %c0_i32_54, %56 : i32
    %58 = arith.minsi %c416_i32_55, %57 : i32
    %c4_56 = arith.constant 4 : index
    %59 = memref.load %arg2[%c4_56] : memref<8xi32, #tpu.memory_space<smem>>
    %c0_i32_57 = arith.constant 0 : i32
    %c17_i32_58 = arith.constant 17 : i32
    %60 = arith.maxsi %c0_i32_57, %59 : i32
    %61 = arith.minsi %c17_i32_58, %60 : i32
    %c0_i32_59 = arith.constant 0 : i32
    %c4_i32 = arith.constant 4 : i32
    %c0_i32_60 = arith.constant 0 : i32
    %62 = tpu.memref_slice %arg8[%58, %c0_i32_60] : memref<417x128xf32, #tpu.memory_space<any>> -> memref<1x128xf32, #tpu.memory_space<any>>
    %c4_i32_61 = arith.constant 4 : i32
    %c0_i32_62 = arith.constant 0 : i32
    %63 = tpu.memref_slice %arg11[%c4_i32_61, %c0_i32_62] : memref<8x128xf32, #tpu.memory_space<vmem>> -> memref<1x128xf32, #tpu.memory_space<vmem>>
    %64 = tpu.memref_slice %arg13[%c0_i32_59, %c4_i32] : memref<2x8x!tpu.dma_semaphore, #tpu.memory_space<semaphore_mem>> -> memref<1x1x!tpu.dma_semaphore, #tpu.memory_space<semaphore_mem>>
    %65 = tpu.memref_squeeze %64 : memref<1x1x!tpu.dma_semaphore, #tpu.memory_space<semaphore_mem>> -> memref<!tpu.dma_semaphore, #tpu.memory_space<semaphore_mem>>
    tpu.enqueue_dma source(%62 : memref<1x128xf32, #tpu.memory_space<any>>) target(%63 : memref<1x128xf32, #tpu.memory_space<vmem>>) target_semaphore(%65 : memref<!tpu.dma_semaphore, #tpu.memory_space<semaphore_mem>>)
    %c1_i32_63 = arith.constant 1 : i32
    %c4_i32_64 = arith.constant 4 : i32
    %c0_i32_65 = arith.constant 0 : i32
    %66 = tpu.memref_slice %arg9[%61, %c0_i32_65] : memref<18x128xf32, #tpu.memory_space<any>> -> memref<1x128xf32, #tpu.memory_space<any>>
    %c4_i32_66 = arith.constant 4 : i32
    %c0_i32_67 = arith.constant 0 : i32
    %67 = tpu.memref_slice %arg12[%c4_i32_66, %c0_i32_67] : memref<8x128xf32, #tpu.memory_space<vmem>> -> memref<1x128xf32, #tpu.memory_space<vmem>>
    %68 = tpu.memref_slice %arg13[%c1_i32_63, %c4_i32_64] : memref<2x8x!tpu.dma_semaphore, #tpu.memory_space<semaphore_mem>> -> memref<1x1x!tpu.dma_semaphore, #tpu.memory_space<semaphore_mem>>
    %69 = tpu.memref_squeeze %68 : memref<1x1x!tpu.dma_semaphore, #tpu.memory_space<semaphore_mem>> -> memref<!tpu.dma_semaphore, #tpu.memory_space<semaphore_mem>>
    tpu.enqueue_dma source(%66 : memref<1x128xf32, #tpu.memory_space<any>>) target(%67 : memref<1x128xf32, #tpu.memory_space<vmem>>) target_semaphore(%69 : memref<!tpu.dma_semaphore, #tpu.memory_space<semaphore_mem>>)
    %c5 = arith.constant 5 : index
    %70 = memref.load %arg1[%c5] : memref<8xi32, #tpu.memory_space<smem>>
    %c0_i32_68 = arith.constant 0 : i32
    %c416_i32_69 = arith.constant 416 : i32
    %71 = arith.maxsi %c0_i32_68, %70 : i32
    %72 = arith.minsi %c416_i32_69, %71 : i32
    %c5_70 = arith.constant 5 : index
    %73 = memref.load %arg2[%c5_70] : memref<8xi32, #tpu.memory_space<smem>>
    %c0_i32_71 = arith.constant 0 : i32
    %c17_i32_72 = arith.constant 17 : i32
    %74 = arith.maxsi %c0_i32_71, %73 : i32
    %75 = arith.minsi %c17_i32_72, %74 : i32
    %c0_i32_73 = arith.constant 0 : i32
    %c5_i32 = arith.constant 5 : i32
    %c0_i32_74 = arith.constant 0 : i32
    %76 = tpu.memref_slice %arg8[%72, %c0_i32_74] : memref<417x128xf32, #tpu.memory_space<any>> -> memref<1x128xf32, #tpu.memory_space<any>>
    %c5_i32_75 = arith.constant 5 : i32
    %c0_i32_76 = arith.constant 0 : i32
    %77 = tpu.memref_slice %arg11[%c5_i32_75, %c0_i32_76] : memref<8x128xf32, #tpu.memory_space<vmem>> -> memref<1x128xf32, #tpu.memory_space<vmem>>
    %78 = tpu.memref_slice %arg13[%c0_i32_73, %c5_i32] : memref<2x8x!tpu.dma_semaphore, #tpu.memory_space<semaphore_mem>> -> memref<1x1x!tpu.dma_semaphore, #tpu.memory_space<semaphore_mem>>
    %79 = tpu.memref_squeeze %78 : memref<1x1x!tpu.dma_semaphore, #tpu.memory_space<semaphore_mem>> -> memref<!tpu.dma_semaphore, #tpu.memory_space<semaphore_mem>>
    tpu.enqueue_dma source(%76 : memref<1x128xf32, #tpu.memory_space<any>>) target(%77 : memref<1x128xf32, #tpu.memory_space<vmem>>) target_semaphore(%79 : memref<!tpu.dma_semaphore, #tpu.memory_space<semaphore_mem>>)
    %c1_i32_77 = arith.constant 1 : i32
    %c5_i32_78 = arith.constant 5 : i32
    %c0_i32_79 = arith.constant 0 : i32
    %80 = tpu.memref_slice %arg9[%75, %c0_i32_79] : memref<18x128xf32, #tpu.memory_space<any>> -> memref<1x128xf32, #tpu.memory_space<any>>
    %c5_i32_80 = arith.constant 5 : i32
    %c0_i32_81 = arith.constant 0 : i32
    %81 = tpu.memref_slice %arg12[%c5_i32_80, %c0_i32_81] : memref<8x128xf32, #tpu.memory_space<vmem>> -> memref<1x128xf32, #tpu.memory_space<vmem>>
    %82 = tpu.memref_slice %arg13[%c1_i32_77, %c5_i32_78] : memref<2x8x!tpu.dma_semaphore, #tpu.memory_space<semaphore_mem>> -> memref<1x1x!tpu.dma_semaphore, #tpu.memory_space<semaphore_mem>>
    %83 = tpu.memref_squeeze %82 : memref<1x1x!tpu.dma_semaphore, #tpu.memory_space<semaphore_mem>> -> memref<!tpu.dma_semaphore, #tpu.memory_space<semaphore_mem>>
    tpu.enqueue_dma source(%80 : memref<1x128xf32, #tpu.memory_space<any>>) target(%81 : memref<1x128xf32, #tpu.memory_space<vmem>>) target_semaphore(%83 : memref<!tpu.dma_semaphore, #tpu.memory_space<semaphore_mem>>)
    %c6 = arith.constant 6 : index
    %84 = memref.load %arg1[%c6] : memref<8xi32, #tpu.memory_space<smem>>
    %c0_i32_82 = arith.constant 0 : i32
    %c416_i32_83 = arith.constant 416 : i32
    %85 = arith.maxsi %c0_i32_82, %84 : i32
    %86 = arith.minsi %c416_i32_83, %85 : i32
    %c6_84 = arith.constant 6 : index
    %87 = memref.load %arg2[%c6_84] : memref<8xi32, #tpu.memory_space<smem>>
    %c0_i32_85 = arith.constant 0 : i32
    %c17_i32_86 = arith.constant 17 : i32
    %88 = arith.maxsi %c0_i32_85, %87 : i32
    %89 = arith.minsi %c17_i32_86, %88 : i32
    %c0_i32_87 = arith.constant 0 : i32
    %c6_i32 = arith.constant 6 : i32
    %c0_i32_88 = arith.constant 0 : i32
    %90 = tpu.memref_slice %arg8[%86, %c0_i32_88] : memref<417x128xf32, #tpu.memory_space<any>> -> memref<1x128xf32, #tpu.memory_space<any>>
    %c6_i32_89 = arith.constant 6 : i32
    %c0_i32_90 = arith.constant 0 : i32
    %91 = tpu.memref_slice %arg11[%c6_i32_89, %c0_i32_90] : memref<8x128xf32, #tpu.memory_space<vmem>> -> memref<1x128xf32, #tpu.memory_space<vmem>>
    %92 = tpu.memref_slice %arg13[%c0_i32_87, %c6_i32] : memref<2x8x!tpu.dma_semaphore, #tpu.memory_space<semaphore_mem>> -> memref<1x1x!tpu.dma_semaphore, #tpu.memory_space<semaphore_mem>>
    %93 = tpu.memref_squeeze %92 : memref<1x1x!tpu.dma_semaphore, #tpu.memory_space<semaphore_mem>> -> memref<!tpu.dma_semaphore, #tpu.memory_space<semaphore_mem>>
    tpu.enqueue_dma source(%90 : memref<1x128xf32, #tpu.memory_space<any>>) target(%91 : memref<1x128xf32, #tpu.memory_space<vmem>>) target_semaphore(%93 : memref<!tpu.dma_semaphore, #tpu.memory_space<semaphore_mem>>)
    %c1_i32_91 = arith.constant 1 : i32
    %c6_i32_92 = arith.constant 6 : i32
    %c0_i32_93 = arith.constant 0 : i32
    %94 = tpu.memref_slice %arg9[%89, %c0_i32_93] : memref<18x128xf32, #tpu.memory_space<any>> -> memref<1x128xf32, #tpu.memory_space<any>>
    %c6_i32_94 = arith.constant 6 : i32
    %c0_i32_95 = arith.constant 0 : i32
    %95 = tpu.memref_slice %arg12[%c6_i32_94, %c0_i32_95] : memref<8x128xf32, #tpu.memory_space<vmem>> -> memref<1x128xf32, #tpu.memory_space<vmem>>
    %96 = tpu.memref_slice %arg13[%c1_i32_91, %c6_i32_92] : memref<2x8x!tpu.dma_semaphore, #tpu.memory_space<semaphore_mem>> -> memref<1x1x!tpu.dma_semaphore, #tpu.memory_space<semaphore_mem>>
    %97 = tpu.memref_squeeze %96 : memref<1x1x!tpu.dma_semaphore, #tpu.memory_space<semaphore_mem>> -> memref<!tpu.dma_semaphore, #tpu.memory_space<semaphore_mem>>
    tpu.enqueue_dma source(%94 : memref<1x128xf32, #tpu.memory_space<any>>) target(%95 : memref<1x128xf32, #tpu.memory_space<vmem>>) target_semaphore(%97 : memref<!tpu.dma_semaphore, #tpu.memory_space<semaphore_mem>>)
    %c7 = arith.constant 7 : index
    %98 = memref.load %arg1[%c7] : memref<8xi32, #tpu.memory_space<smem>>
    %c0_i32_96 = arith.constant 0 : i32
    %c416_i32_97 = arith.constant 416 : i32
    %99 = arith.maxsi %c0_i32_96, %98 : i32
    %100 = arith.minsi %c416_i32_97, %99 : i32
    %c7_98 = arith.constant 7 : index
    %101 = memref.load %arg2[%c7_98] : memref<8xi32, #tpu.memory_space<smem>>
    %c0_i32_99 = arith.constant 0 : i32
    %c17_i32_100 = arith.constant 17 : i32
    %102 = arith.maxsi %c0_i32_99, %101 : i32
    %103 = arith.minsi %c17_i32_100, %102 : i32
    %c0_i32_101 = arith.constant 0 : i32
    %c7_i32 = arith.constant 7 : i32
    %c0_i32_102 = arith.constant 0 : i32
    %104 = tpu.memref_slice %arg8[%100, %c0_i32_102] : memref<417x128xf32, #tpu.memory_space<any>> -> memref<1x128xf32, #tpu.memory_space<any>>
    %c7_i32_103 = arith.constant 7 : i32
    %c0_i32_104 = arith.constant 0 : i32
    %105 = tpu.memref_slice %arg11[%c7_i32_103, %c0_i32_104] : memref<8x128xf32, #tpu.memory_space<vmem>> -> memref<1x128xf32, #tpu.memory_space<vmem>>
    %106 = tpu.memref_slice %arg13[%c0_i32_101, %c7_i32] : memref<2x8x!tpu.dma_semaphore, #tpu.memory_space<semaphore_mem>> -> memref<1x1x!tpu.dma_semaphore, #tpu.memory_space<semaphore_mem>>
    %107 = tpu.memref_squeeze %106 : memref<1x1x!tpu.dma_semaphore, #tpu.memory_space<semaphore_mem>> -> memref<!tpu.dma_semaphore, #tpu.memory_space<semaphore_mem>>
    tpu.enqueue_dma source(%104 : memref<1x128xf32, #tpu.memory_space<any>>) target(%105 : memref<1x128xf32, #tpu.memory_space<vmem>>) target_semaphore(%107 : memref<!tpu.dma_semaphore, #tpu.memory_space<semaphore_mem>>)
    %c1_i32_105 = arith.constant 1 : i32
    %c7_i32_106 = arith.constant 7 : i32
    %c0_i32_107 = arith.constant 0 : i32
    %108 = tpu.memref_slice %arg9[%103, %c0_i32_107] : memref<18x128xf32, #tpu.memory_space<any>> -> memref<1x128xf32, #tpu.memory_space<any>>
    %c7_i32_108 = arith.constant 7 : i32
    %c0_i32_109 = arith.constant 0 : i32
    %109 = tpu.memref_slice %arg12[%c7_i32_108, %c0_i32_109] : memref<8x128xf32, #tpu.memory_space<vmem>> -> memref<1x128xf32, #tpu.memory_space<vmem>>
    %110 = tpu.memref_slice %arg13[%c1_i32_105, %c7_i32_106] : memref<2x8x!tpu.dma_semaphore, #tpu.memory_space<semaphore_mem>> -> memref<1x1x!tpu.dma_semaphore, #tpu.memory_space<semaphore_mem>>
    %111 = tpu.memref_squeeze %110 : memref<1x1x!tpu.dma_semaphore, #tpu.memory_space<semaphore_mem>> -> memref<!tpu.dma_semaphore, #tpu.memory_space<semaphore_mem>>
    tpu.enqueue_dma source(%108 : memref<1x128xf32, #tpu.memory_space<any>>) target(%109 : memref<1x128xf32, #tpu.memory_space<vmem>>) target_semaphore(%111 : memref<!tpu.dma_semaphore, #tpu.memory_space<semaphore_mem>>)
    %c0_110 = arith.constant 0 : index
    %c0_111 = arith.constant 0 : index
    %112 = vector.load %arg3[%c0_110, %c0_111] : memref<8x16xf32, #tpu.memory_space<vmem>>, vector<8x16xf32>
    %cst = arith.constant dense<0.000000e+00> : vector<16xf32>
    %113 = vector.multi_reduction <add>, %112, %cst [0] : vector<8x16xf32> to vector<16xf32>
    %114 = vector.shape_cast %113 : vector<16xf32> to vector<1x16xf32>
    %cst_112 = arith.constant 8.000000e+00 : f32
    %115 = vector.broadcast %cst_112 : f32 to vector<1x16xf32>
    %116 = arith.divf %114, %115 : vector<1x16xf32>
    %117 = vector.broadcast %116 : vector<1x16xf32> to vector<8x16xf32>
    %118 = arith.subf %112, %117 : vector<8x16xf32>
    %119 = arith.mulf %118, %118 : vector<8x16xf32>
    %cst_113 = arith.constant dense<0.000000e+00> : vector<16xf32>
    %120 = vector.multi_reduction <add>, %119, %cst_113 [0] : vector<8x16xf32> to vector<16xf32>
    %121 = vector.shape_cast %120 : vector<16xf32> to vector<1x16xf32>
    %cst_114 = arith.constant 8.000000e+00 : f32
    %122 = vector.broadcast %cst_114 : f32 to vector<1x16xf32>
    %123 = arith.divf %121, %122 : vector<1x16xf32>
    %c0_115 = arith.constant 0 : index
    %c0_116 = arith.constant 0 : index
    %124 = vector.load %arg4[%c0_115, %c0_116] : memref<1x16xf32, #tpu.memory_space<vmem>>, vector<1x16xf32>
    %cst_117 = arith.constant 9.99999974E-6 : f32
    %125 = vector.broadcast %cst_117 : f32 to vector<1x16xf32>
    %126 = arith.addf %123, %125 : vector<1x16xf32>
    %127 = math.rsqrt %126 : vector<1x16xf32>
    %128 = arith.mulf %124, %127 : vector<1x16xf32>
    %129 = vector.broadcast %116 : vector<1x16xf32> to vector<8x16xf32>
    %130 = arith.subf %112, %129 : vector<8x16xf32>
    %131 = vector.broadcast %128 : vector<1x16xf32> to vector<8x16xf32>
    %132 = arith.mulf %130, %131 : vector<8x16xf32>
    %c0_118 = arith.constant 0 : index
    %c0_119 = arith.constant 0 : index
    %133 = vector.load %arg5[%c0_118, %c0_119] : memref<1x16xf32, #tpu.memory_space<vmem>>, vector<1x16xf32>
    %134 = vector.broadcast %133 : vector<1x16xf32> to vector<8x16xf32>
    %135 = arith.addf %132, %134 : vector<8x16xf32>
    %c0_120 = arith.constant 0 : index
    %c0_121 = arith.constant 0 : index
    %136 = vector.load %arg6[%c0_120, %c0_121] : memref<16x128xf32, #tpu.memory_space<vmem>>, vector<16x128xf32>
    %cst_122 = arith.constant dense<0.000000e+00> : vector<8x128xf32>
    %137 = tpu.matmul %135, %136, %cst_122 {dimension_numbers = #tpu.dot_dimension_numbers<[1], [0], [0], [1], [0, 0, 1, 1], [], []>} : vector<8x16xf32>, vector<16x128xf32>, vector<8x128xf32> -> vector<8x128xf32>
    %c0_123 = arith.constant 0 : index
    %c0_124 = arith.constant 0 : index
    %138 = vector.load %arg7[%c0_123, %c0_124] : memref<1x128xf32, #tpu.memory_space<vmem>>, vector<1x128xf32>
    %139 = vector.broadcast %138 : vector<1x128xf32> to vector<8x128xf32>
    %140 = arith.addf %137, %139 : vector<8x128xf32>
    %c0_i32_125 = arith.constant 0 : i32
    %c0_i32_126 = arith.constant 0 : i32
    %c0_i32_127 = arith.constant 0 : i32
    %141 = tpu.memref_slice %arg8[%2, %c0_i32_127] : memref<417x128xf32, #tpu.memory_space<any>> -> memref<1x128xf32, #tpu.memory_space<any>>
    %c0_i32_128 = arith.constant 0 : i32
    %c0_i32_129 = arith.constant 0 : i32
    %142 = tpu.memref_slice %arg11[%c0_i32_128, %c0_i32_129] : memref<8x128xf32, #tpu.memory_space<vmem>> -> memref<1x128xf32, #tpu.memory_space<vmem>>
    %143 = tpu.memref_slice %arg13[%c0_i32_125, %c0_i32_126] : memref<2x8x!tpu.dma_semaphore, #tpu.memory_space<semaphore_mem>> -> memref<1x1x!tpu.dma_semaphore, #tpu.memory_space<semaphore_mem>>
    %144 = tpu.memref_squeeze %143 : memref<1x1x!tpu.dma_semaphore, #tpu.memory_space<semaphore_mem>> -> memref<!tpu.dma_semaphore, #tpu.memory_space<semaphore_mem>>
    tpu.wait_dma2 semaphore(%144 : memref<!tpu.dma_semaphore, #tpu.memory_space<semaphore_mem>>) src(%141 : memref<1x128xf32, #tpu.memory_space<any>>) dst(%142 : memref<1x128xf32, #tpu.memory_space<vmem>>)
    %c1_i32_130 = arith.constant 1 : i32
    %c0_i32_131 = arith.constant 0 : i32
    %c0_i32_132 = arith.constant 0 : i32
    %145 = tpu.memref_slice %arg9[%5, %c0_i32_132] : memref<18x128xf32, #tpu.memory_space<any>> -> memref<1x128xf32, #tpu.memory_space<any>>
    %c0_i32_133 = arith.constant 0 : i32
    %c0_i32_134 = arith.constant 0 : i32
    %146 = tpu.memref_slice %arg12[%c0_i32_133, %c0_i32_134] : memref<8x128xf32, #tpu.memory_space<vmem>> -> memref<1x128xf32, #tpu.memory_space<vmem>>
    %147 = tpu.memref_slice %arg13[%c1_i32_130, %c0_i32_131] : memref<2x8x!tpu.dma_semaphore, #tpu.memory_space<semaphore_mem>> -> memref<1x1x!tpu.dma_semaphore, #tpu.memory_space<semaphore_mem>>
    %148 = tpu.memref_squeeze %147 : memref<1x1x!tpu.dma_semaphore, #tpu.memory_space<semaphore_mem>> -> memref<!tpu.dma_semaphore, #tpu.memory_space<semaphore_mem>>
    tpu.wait_dma2 semaphore(%148 : memref<!tpu.dma_semaphore, #tpu.memory_space<semaphore_mem>>) src(%145 : memref<1x128xf32, #tpu.memory_space<any>>) dst(%146 : memref<1x128xf32, #tpu.memory_space<vmem>>)
    %c0_i32_135 = arith.constant 0 : i32
    %c1_i32_136 = arith.constant 1 : i32
    %c0_i32_137 = arith.constant 0 : i32
    %149 = tpu.memref_slice %arg8[%16, %c0_i32_137] : memref<417x128xf32, #tpu.memory_space<any>> -> memref<1x128xf32, #tpu.memory_space<any>>
    %c1_i32_138 = arith.constant 1 : i32
    %c0_i32_139 = arith.constant 0 : i32
    %150 = tpu.memref_slice %arg11[%c1_i32_138, %c0_i32_139] : memref<8x128xf32, #tpu.memory_space<vmem>> -> memref<1x128xf32, #tpu.memory_space<vmem>>
    %151 = tpu.memref_slice %arg13[%c0_i32_135, %c1_i32_136] : memref<2x8x!tpu.dma_semaphore, #tpu.memory_space<semaphore_mem>> -> memref<1x1x!tpu.dma_semaphore, #tpu.memory_space<semaphore_mem>>
    %152 = tpu.memref_squeeze %151 : memref<1x1x!tpu.dma_semaphore, #tpu.memory_space<semaphore_mem>> -> memref<!tpu.dma_semaphore, #tpu.memory_space<semaphore_mem>>
    tpu.wait_dma2 semaphore(%152 : memref<!tpu.dma_semaphore, #tpu.memory_space<semaphore_mem>>) src(%149 : memref<1x128xf32, #tpu.memory_space<any>>) dst(%150 : memref<1x128xf32, #tpu.memory_space<vmem>>)
    %c1_i32_140 = arith.constant 1 : i32
    %c1_i32_141 = arith.constant 1 : i32
    %c0_i32_142 = arith.constant 0 : i32
    %153 = tpu.memref_slice %arg9[%19, %c0_i32_142] : memref<18x128xf32, #tpu.memory_space<any>> -> memref<1x128xf32, #tpu.memory_space<any>>
    %c1_i32_143 = arith.constant 1 : i32
    %c0_i32_144 = arith.constant 0 : i32
    %154 = tpu.memref_slice %arg12[%c1_i32_143, %c0_i32_144] : memref<8x128xf32, #tpu.memory_space<vmem>> -> memref<1x128xf32, #tpu.memory_space<vmem>>
    %155 = tpu.memref_slice %arg13[%c1_i32_140, %c1_i32_141] : memref<2x8x!tpu.dma_semaphore, #tpu.memory_space<semaphore_mem>> -> memref<1x1x!tpu.dma_semaphore, #tpu.memory_space<semaphore_mem>>
    %156 = tpu.memref_squeeze %155 : memref<1x1x!tpu.dma_semaphore, #tpu.memory_space<semaphore_mem>> -> memref<!tpu.dma_semaphore, #tpu.memory_space<semaphore_mem>>
    tpu.wait_dma2 semaphore(%156 : memref<!tpu.dma_semaphore, #tpu.memory_space<semaphore_mem>>) src(%153 : memref<1x128xf32, #tpu.memory_space<any>>) dst(%154 : memref<1x128xf32, #tpu.memory_space<vmem>>)
    %c0_i32_145 = arith.constant 0 : i32
    %c2_i32_146 = arith.constant 2 : i32
    %c0_i32_147 = arith.constant 0 : i32
    %157 = tpu.memref_slice %arg8[%30, %c0_i32_147] : memref<417x128xf32, #tpu.memory_space<any>> -> memref<1x128xf32, #tpu.memory_space<any>>
    %c2_i32_148 = arith.constant 2 : i32
    %c0_i32_149 = arith.constant 0 : i32
    %158 = tpu.memref_slice %arg11[%c2_i32_148, %c0_i32_149] : memref<8x128xf32, #tpu.memory_space<vmem>> -> memref<1x128xf32, #tpu.memory_space<vmem>>
    %159 = tpu.memref_slice %arg13[%c0_i32_145, %c2_i32_146] : memref<2x8x!tpu.dma_semaphore, #tpu.memory_space<semaphore_mem>> -> memref<1x1x!tpu.dma_semaphore, #tpu.memory_space<semaphore_mem>>
    %160 = tpu.memref_squeeze %159 : memref<1x1x!tpu.dma_semaphore, #tpu.memory_space<semaphore_mem>> -> memref<!tpu.dma_semaphore, #tpu.memory_space<semaphore_mem>>
    tpu.wait_dma2 semaphore(%160 : memref<!tpu.dma_semaphore, #tpu.memory_space<semaphore_mem>>) src(%157 : memref<1x128xf32, #tpu.memory_space<any>>) dst(%158 : memref<1x128xf32, #tpu.memory_space<vmem>>)
    %c1_i32_150 = arith.constant 1 : i32
    %c2_i32_151 = arith.constant 2 : i32
    %c0_i32_152 = arith.constant 0 : i32
    %161 = tpu.memref_slice %arg9[%33, %c0_i32_152] : memref<18x128xf32, #tpu.memory_space<any>> -> memref<1x128xf32, #tpu.memory_space<any>>
    %c2_i32_153 = arith.constant 2 : i32
    %c0_i32_154 = arith.constant 0 : i32
    %162 = tpu.memref_slice %arg12[%c2_i32_153, %c0_i32_154] : memref<8x128xf32, #tpu.memory_space<vmem>> -> memref<1x128xf32, #tpu.memory_space<vmem>>
    %163 = tpu.memref_slice %arg13[%c1_i32_150, %c2_i32_151] : memref<2x8x!tpu.dma_semaphore, #tpu.memory_space<semaphore_mem>> -> memref<1x1x!tpu.dma_semaphore, #tpu.memory_space<semaphore_mem>>
    %164 = tpu.memref_squeeze %163 : memref<1x1x!tpu.dma_semaphore, #tpu.memory_space<semaphore_mem>> -> memref<!tpu.dma_semaphore, #tpu.memory_space<semaphore_mem>>
    tpu.wait_dma2 semaphore(%164 : memref<!tpu.dma_semaphore, #tpu.memory_space<semaphore_mem>>) src(%161 : memref<1x128xf32, #tpu.memory_space<any>>) dst(%162 : memref<1x128xf32, #tpu.memory_space<vmem>>)
    %c0_i32_155 = arith.constant 0 : i32
    %c3_i32_156 = arith.constant 3 : i32
    %c0_i32_157 = arith.constant 0 : i32
    %165 = tpu.memref_slice %arg8[%44, %c0_i32_157] : memref<417x128xf32, #tpu.memory_space<any>> -> memref<1x128xf32, #tpu.memory_space<any>>
    %c3_i32_158 = arith.constant 3 : i32
    %c0_i32_159 = arith.constant 0 : i32
    %166 = tpu.memref_slice %arg11[%c3_i32_158, %c0_i32_159] : memref<8x128xf32, #tpu.memory_space<vmem>> -> memref<1x128xf32, #tpu.memory_space<vmem>>
    %167 = tpu.memref_slice %arg13[%c0_i32_155, %c3_i32_156] : memref<2x8x!tpu.dma_semaphore, #tpu.memory_space<semaphore_mem>> -> memref<1x1x!tpu.dma_semaphore, #tpu.memory_space<semaphore_mem>>
    %168 = tpu.memref_squeeze %167 : memref<1x1x!tpu.dma_semaphore, #tpu.memory_space<semaphore_mem>> -> memref<!tpu.dma_semaphore, #tpu.memory_space<semaphore_mem>>
    tpu.wait_dma2 semaphore(%168 : memref<!tpu.dma_semaphore, #tpu.memory_space<semaphore_mem>>) src(%165 : memref<1x128xf32, #tpu.memory_space<any>>) dst(%166 : memref<1x128xf32, #tpu.memory_space<vmem>>)
    %c1_i32_160 = arith.constant 1 : i32
    %c3_i32_161 = arith.constant 3 : i32
    %c0_i32_162 = arith.constant 0 : i32
    %169 = tpu.memref_slice %arg9[%47, %c0_i32_162] : memref<18x128xf32, #tpu.memory_space<any>> -> memref<1x128xf32, #tpu.memory_space<any>>
    %c3_i32_163 = arith.constant 3 : i32
    %c0_i32_164 = arith.constant 0 : i32
    %170 = tpu.memref_slice %arg12[%c3_i32_163, %c0_i32_164] : memref<8x128xf32, #tpu.memory_space<vmem>> -> memref<1x128xf32, #tpu.memory_space<vmem>>
    %171 = tpu.memref_slice %arg13[%c1_i32_160, %c3_i32_161] : memref<2x8x!tpu.dma_semaphore, #tpu.memory_space<semaphore_mem>> -> memref<1x1x!tpu.dma_semaphore, #tpu.memory_space<semaphore_mem>>
    %172 = tpu.memref_squeeze %171 : memref<1x1x!tpu.dma_semaphore, #tpu.memory_space<semaphore_mem>> -> memref<!tpu.dma_semaphore, #tpu.memory_space<semaphore_mem>>
    tpu.wait_dma2 semaphore(%172 : memref<!tpu.dma_semaphore, #tpu.memory_space<semaphore_mem>>) src(%169 : memref<1x128xf32, #tpu.memory_space<any>>) dst(%170 : memref<1x128xf32, #tpu.memory_space<vmem>>)
    %c0_i32_165 = arith.constant 0 : i32
    %c4_i32_166 = arith.constant 4 : i32
    %c0_i32_167 = arith.constant 0 : i32
    %173 = tpu.memref_slice %arg8[%58, %c0_i32_167] : memref<417x128xf32, #tpu.memory_space<any>> -> memref<1x128xf32, #tpu.memory_space<any>>
    %c4_i32_168 = arith.constant 4 : i32
    %c0_i32_169 = arith.constant 0 : i32
    %174 = tpu.memref_slice %arg11[%c4_i32_168, %c0_i32_169] : memref<8x128xf32, #tpu.memory_space<vmem>> -> memref<1x128xf32, #tpu.memory_space<vmem>>
    %175 = tpu.memref_slice %arg13[%c0_i32_165, %c4_i32_166] : memref<2x8x!tpu.dma_semaphore, #tpu.memory_space<semaphore_mem>> -> memref<1x1x!tpu.dma_semaphore, #tpu.memory_space<semaphore_mem>>
    %176 = tpu.memref_squeeze %175 : memref<1x1x!tpu.dma_semaphore, #tpu.memory_space<semaphore_mem>> -> memref<!tpu.dma_semaphore, #tpu.memory_space<semaphore_mem>>
    tpu.wait_dma2 semaphore(%176 : memref<!tpu.dma_semaphore, #tpu.memory_space<semaphore_mem>>) src(%173 : memref<1x128xf32, #tpu.memory_space<any>>) dst(%174 : memref<1x128xf32, #tpu.memory_space<vmem>>)
    %c1_i32_170 = arith.constant 1 : i32
    %c4_i32_171 = arith.constant 4 : i32
    %c0_i32_172 = arith.constant 0 : i32
    %177 = tpu.memref_slice %arg9[%61, %c0_i32_172] : memref<18x128xf32, #tpu.memory_space<any>> -> memref<1x128xf32, #tpu.memory_space<any>>
    %c4_i32_173 = arith.constant 4 : i32
    %c0_i32_174 = arith.constant 0 : i32
    %178 = tpu.memref_slice %arg12[%c4_i32_173, %c0_i32_174] : memref<8x128xf32, #tpu.memory_space<vmem>> -> memref<1x128xf32, #tpu.memory_space<vmem>>
    %179 = tpu.memref_slice %arg13[%c1_i32_170, %c4_i32_171] : memref<2x8x!tpu.dma_semaphore, #tpu.memory_space<semaphore_mem>> -> memref<1x1x!tpu.dma_semaphore, #tpu.memory_space<semaphore_mem>>
    %180 = tpu.memref_squeeze %179 : memref<1x1x!tpu.dma_semaphore, #tpu.memory_space<semaphore_mem>> -> memref<!tpu.dma_semaphore, #tpu.memory_space<semaphore_mem>>
    tpu.wait_dma2 semaphore(%180 : memref<!tpu.dma_semaphore, #tpu.memory_space<semaphore_mem>>) src(%177 : memref<1x128xf32, #tpu.memory_space<any>>) dst(%178 : memref<1x128xf32, #tpu.memory_space<vmem>>)
    %c0_i32_175 = arith.constant 0 : i32
    %c5_i32_176 = arith.constant 5 : i32
    %c0_i32_177 = arith.constant 0 : i32
    %181 = tpu.memref_slice %arg8[%72, %c0_i32_177] : memref<417x128xf32, #tpu.memory_space<any>> -> memref<1x128xf32, #tpu.memory_space<any>>
    %c5_i32_178 = arith.constant 5 : i32
    %c0_i32_179 = arith.constant 0 : i32
    %182 = tpu.memref_slice %arg11[%c5_i32_178, %c0_i32_179] : memref<8x128xf32, #tpu.memory_space<vmem>> -> memref<1x128xf32, #tpu.memory_space<vmem>>
    %183 = tpu.memref_slice %arg13[%c0_i32_175, %c5_i32_176] : memref<2x8x!tpu.dma_semaphore, #tpu.memory_space<semaphore_mem>> -> memref<1x1x!tpu.dma_semaphore, #tpu.memory_space<semaphore_mem>>
    %184 = tpu.memref_squeeze %183 : memref<1x1x!tpu.dma_semaphore, #tpu.memory_space<semaphore_mem>> -> memref<!tpu.dma_semaphore, #tpu.memory_space<semaphore_mem>>
    tpu.wait_dma2 semaphore(%184 : memref<!tpu.dma_semaphore, #tpu.memory_space<semaphore_mem>>) src(%181 : memref<1x128xf32, #tpu.memory_space<any>>) dst(%182 : memref<1x128xf32, #tpu.memory_space<vmem>>)
    %c1_i32_180 = arith.constant 1 : i32
    %c5_i32_181 = arith.constant 5 : i32
    %c0_i32_182 = arith.constant 0 : i32
    %185 = tpu.memref_slice %arg9[%75, %c0_i32_182] : memref<18x128xf32, #tpu.memory_space<any>> -> memref<1x128xf32, #tpu.memory_space<any>>
    %c5_i32_183 = arith.constant 5 : i32
    %c0_i32_184 = arith.constant 0 : i32
    %186 = tpu.memref_slice %arg12[%c5_i32_183, %c0_i32_184] : memref<8x128xf32, #tpu.memory_space<vmem>> -> memref<1x128xf32, #tpu.memory_space<vmem>>
    %187 = tpu.memref_slice %arg13[%c1_i32_180, %c5_i32_181] : memref<2x8x!tpu.dma_semaphore, #tpu.memory_space<semaphore_mem>> -> memref<1x1x!tpu.dma_semaphore, #tpu.memory_space<semaphore_mem>>
    %188 = tpu.memref_squeeze %187 : memref<1x1x!tpu.dma_semaphore, #tpu.memory_space<semaphore_mem>> -> memref<!tpu.dma_semaphore, #tpu.memory_space<semaphore_mem>>
    tpu.wait_dma2 semaphore(%188 : memref<!tpu.dma_semaphore, #tpu.memory_space<semaphore_mem>>) src(%185 : memref<1x128xf32, #tpu.memory_space<any>>) dst(%186 : memref<1x128xf32, #tpu.memory_space<vmem>>)
    %c0_i32_185 = arith.constant 0 : i32
    %c6_i32_186 = arith.constant 6 : i32
    %c0_i32_187 = arith.constant 0 : i32
    %189 = tpu.memref_slice %arg8[%86, %c0_i32_187] : memref<417x128xf32, #tpu.memory_space<any>> -> memref<1x128xf32, #tpu.memory_space<any>>
    %c6_i32_188 = arith.constant 6 : i32
    %c0_i32_189 = arith.constant 0 : i32
    %190 = tpu.memref_slice %arg11[%c6_i32_188, %c0_i32_189] : memref<8x128xf32, #tpu.memory_space<vmem>> -> memref<1x128xf32, #tpu.memory_space<vmem>>
    %191 = tpu.memref_slice %arg13[%c0_i32_185, %c6_i32_186] : memref<2x8x!tpu.dma_semaphore, #tpu.memory_space<semaphore_mem>> -> memref<1x1x!tpu.dma_semaphore, #tpu.memory_space<semaphore_mem>>
    %192 = tpu.memref_squeeze %191 : memref<1x1x!tpu.dma_semaphore, #tpu.memory_space<semaphore_mem>> -> memref<!tpu.dma_semaphore, #tpu.memory_space<semaphore_mem>>
    tpu.wait_dma2 semaphore(%192 : memref<!tpu.dma_semaphore, #tpu.memory_space<semaphore_mem>>) src(%189 : memref<1x128xf32, #tpu.memory_space<any>>) dst(%190 : memref<1x128xf32, #tpu.memory_space<vmem>>)
    %c1_i32_190 = arith.constant 1 : i32
    %c6_i32_191 = arith.constant 6 : i32
    %c0_i32_192 = arith.constant 0 : i32
    %193 = tpu.memref_slice %arg9[%89, %c0_i32_192] : memref<18x128xf32, #tpu.memory_space<any>> -> memref<1x128xf32, #tpu.memory_space<any>>
    %c6_i32_193 = arith.constant 6 : i32
    %c0_i32_194 = arith.constant 0 : i32
    %194 = tpu.memref_slice %arg12[%c6_i32_193, %c0_i32_194] : memref<8x128xf32, #tpu.memory_space<vmem>> -> memref<1x128xf32, #tpu.memory_space<vmem>>
    %195 = tpu.memref_slice %arg13[%c1_i32_190, %c6_i32_191] : memref<2x8x!tpu.dma_semaphore, #tpu.memory_space<semaphore_mem>> -> memref<1x1x!tpu.dma_semaphore, #tpu.memory_space<semaphore_mem>>
    %196 = tpu.memref_squeeze %195 : memref<1x1x!tpu.dma_semaphore, #tpu.memory_space<semaphore_mem>> -> memref<!tpu.dma_semaphore, #tpu.memory_space<semaphore_mem>>
    tpu.wait_dma2 semaphore(%196 : memref<!tpu.dma_semaphore, #tpu.memory_space<semaphore_mem>>) src(%193 : memref<1x128xf32, #tpu.memory_space<any>>) dst(%194 : memref<1x128xf32, #tpu.memory_space<vmem>>)
    %c0_i32_195 = arith.constant 0 : i32
    %c7_i32_196 = arith.constant 7 : i32
    %c0_i32_197 = arith.constant 0 : i32
    %197 = tpu.memref_slice %arg8[%100, %c0_i32_197] : memref<417x128xf32, #tpu.memory_space<any>> -> memref<1x128xf32, #tpu.memory_space<any>>
    %c7_i32_198 = arith.constant 7 : i32
    %c0_i32_199 = arith.constant 0 : i32
    %198 = tpu.memref_slice %arg11[%c7_i32_198, %c0_i32_199] : memref<8x128xf32, #tpu.memory_space<vmem>> -> memref<1x128xf32, #tpu.memory_space<vmem>>
    %199 = tpu.memref_slice %arg13[%c0_i32_195, %c7_i32_196] : memref<2x8x!tpu.dma_semaphore, #tpu.memory_space<semaphore_mem>> -> memref<1x1x!tpu.dma_semaphore, #tpu.memory_space<semaphore_mem>>
    %200 = tpu.memref_squeeze %199 : memref<1x1x!tpu.dma_semaphore, #tpu.memory_space<semaphore_mem>> -> memref<!tpu.dma_semaphore, #tpu.memory_space<semaphore_mem>>
    tpu.wait_dma2 semaphore(%200 : memref<!tpu.dma_semaphore, #tpu.memory_space<semaphore_mem>>) src(%197 : memref<1x128xf32, #tpu.memory_space<any>>) dst(%198 : memref<1x128xf32, #tpu.memory_space<vmem>>)
    %c1_i32_200 = arith.constant 1 : i32
    %c7_i32_201 = arith.constant 7 : i32
    %c0_i32_202 = arith.constant 0 : i32
    %201 = tpu.memref_slice %arg9[%103, %c0_i32_202] : memref<18x128xf32, #tpu.memory_space<any>> -> memref<1x128xf32, #tpu.memory_space<any>>
    %c7_i32_203 = arith.constant 7 : i32
    %c0_i32_204 = arith.constant 0 : i32
    %202 = tpu.memref_slice %arg12[%c7_i32_203, %c0_i32_204] : memref<8x128xf32, #tpu.memory_space<vmem>> -> memref<1x128xf32, #tpu.memory_space<vmem>>
    %203 = tpu.memref_slice %arg13[%c1_i32_200, %c7_i32_201] : memref<2x8x!tpu.dma_semaphore, #tpu.memory_space<semaphore_mem>> -> memref<1x1x!tpu.dma_semaphore, #tpu.memory_space<semaphore_mem>>
    %204 = tpu.memref_squeeze %203 : memref<1x1x!tpu.dma_semaphore, #tpu.memory_space<semaphore_mem>> -> memref<!tpu.dma_semaphore, #tpu.memory_space<semaphore_mem>>
    tpu.wait_dma2 semaphore(%204 : memref<!tpu.dma_semaphore, #tpu.memory_space<semaphore_mem>>) src(%201 : memref<1x128xf32, #tpu.memory_space<any>>) dst(%202 : memref<1x128xf32, #tpu.memory_space<vmem>>)
    %c0_205 = arith.constant 0 : index
    %c0_206 = arith.constant 0 : index
    %205 = vector.load %arg11[%c0_205, %c0_206] : memref<8x128xf32, #tpu.memory_space<vmem>>, vector<8x128xf32>
    %206 = arith.addf %140, %205 : vector<8x128xf32>
    %c0_207 = arith.constant 0 : index
    %c0_208 = arith.constant 0 : index
    %207 = vector.load %arg12[%c0_207, %c0_208] : memref<8x128xf32, #tpu.memory_space<vmem>>, vector<8x128xf32>
    %208 = arith.addf %206, %207 : vector<8x128xf32>
    %c0_209 = arith.constant 0 : index
    %c0_210 = arith.constant 0 : index
    %209 = vector.load %arg10[%c0_209, %c0_210] : memref<8x128xf32, #tpu.memory_space<vmem>>, vector<8x128xf32>
    tpu.vector_store %arg10[%c0_209, %c0_210], %208 {strides = array<i32>} : memref<8x128xf32, #tpu.memory_space<vmem>>, vector<8x128xf32>,
    return
  }
  func.func @transform_0(%arg0: i32, %arg1: memref<8xi32, #tpu.memory_space<smem>>, %arg2: memref<8xi32, #tpu.memory_space<smem>>) -> (i32, i32) {
    %c0_i32 = arith.constant 0 : i32
    %c0_i32_0 = arith.constant 0 : i32
    %c0_i32_1 = arith.constant 0 : i32
    return %c0_i32, %c0_i32_0 : i32, i32
  }
  func.func @transform_1(%arg0: i32, %arg1: memref<8xi32, #tpu.memory_space<smem>>, %arg2: memref<8xi32, #tpu.memory_space<smem>>) -> (i32, i32) {
    %c0_i32 = arith.constant 0 : i32
    %c0_i32_0 = arith.constant 0 : i32
    %c0_i32_1 = arith.constant 0 : i32
    return %c0_i32, %c0_i32_0 : i32, i32
  }
  func.func @transform_2(%arg0: i32, %arg1: memref<8xi32, #tpu.memory_space<smem>>, %arg2: memref<8xi32, #tpu.memory_space<smem>>) -> (i32, i32) {
    %c0_i32 = arith.constant 0 : i32
    %c0_i32_0 = arith.constant 0 : i32
    %c0_i32_1 = arith.constant 0 : i32
    return %c0_i32, %c0_i32_0 : i32, i32
  }
  func.func @transform_3(%arg0: i32, %arg1: memref<8xi32, #tpu.memory_space<smem>>, %arg2: memref<8xi32, #tpu.memory_space<smem>>) -> (i32, i32) {
    %c0_i32 = arith.constant 0 : i32
    %c0_i32_0 = arith.constant 0 : i32
    %c0_i32_1 = arith.constant 0 : i32
    return %c0_i32, %c0_i32_0 : i32, i32
  }
  func.func @transform_4(%arg0: i32, %arg1: memref<8xi32, #tpu.memory_space<smem>>, %arg2: memref<8xi32, #tpu.memory_space<smem>>) -> (i32, i32) {
    %c0_i32 = arith.constant 0 : i32
    %c0_i32_0 = arith.constant 0 : i32
    %c0_i32_1 = arith.constant 0 : i32
    return %c0_i32, %c0_i32_0 : i32, i32
  }
  func.func @transform_7(%arg0: i32, %arg1: memref<8xi32, #tpu.memory_space<smem>>, %arg2: memref<8xi32, #tpu.memory_space<smem>>) -> (i32, i32) {
    %c0_i32 = arith.constant 0 : i32
    %c0_i32_0 = arith.constant 0 : i32
    %c0_i32_1 = arith.constant 0 : i32
    return %c0_i32, %c0_i32_0 : i32, i32
  }
}

</mosaic_0001>

<llo_original>
// kernel: music_encoder_forward.1
$region0: #{music_encoder_forward.1}
  #allocation0 [shape = 'u32[]', space=smem, size = 0x4, offset = 0x4, fixed_abs, tag = 'smem constant byte address 0x4 - core index']
  #allocation1 [shape = 'u32[144,128]{1,0:T(1,128)}', space=vmem, size = 0x12000, scoped, tag = 'internal scratch']
  #allocation2 [shape = 'f32[8,128]{1,0:T(8,128)}', space=vmem, size = 0x1000, scoped, tag = 'scratch operand']
  #allocation3 [shape = 'f32[8,128]{1,0:T(8,128)}', space=vmem, size = 0x1000, scoped, tag = 'scratch operand']
  #allocation4 [shape = 's32[16]{0}', space=sflag, size = 0x40, scoped, tag = 'scratch operand']
  #allocation5 [shape = 's32[1]{0}', space=sflag, size = 0x4, scoped, tag = 'scoped memory for music_encoder_forward.1']
  #allocation6 [shape = 'u8[512]{0}', space=smem, size = 0x200, scoped, tag = 'prefetched SMEM operand 0']
  #allocation7 [shape = 'u8[512]{0}', space=smem, size = 0x200, scoped, tag = 'prefetched SMEM operand 1']
  #allocation17 [shape = 's32[]', space=sflag, size = 0x4, offset = 0, fixed_abs, tag = 'sflag constant byte address 0x0 - dummy sync flag']
  #allocation18 [shape = 's32[]', space=sflag, size = 0x4, offset = 0, fixed_abs, tag = 'sflag constant byte address 0x0 - dummy sync flag']
  #allocation19 [shape = 'u32[]', space=smem, size = 0x4, offset = 0x44, fixed_abs, tag = 'smem constant byte address 0x44 - assertion arg 0']
  #allocation20 [shape = 'u32[]', space=smem, size = 0x4, offset = 0x48, fixed_abs, tag = 'smem constant byte address 0x48 - assertion arg 1']
  #allocation21 [shape = 's32[]', space=sflag, size = 0x4, offset = 0, fixed_abs, tag = 'sflag constant byte address 0x0 - dummy sync flag']
  #allocation22 [shape = 's32[]', space=sflag, size = 0x4, offset = 0, fixed_abs, tag = 'sflag constant byte address 0x0 - dummy sync flag']
  #allocation23 [shape = 's32[]', space=sflag, size = 0x4, offset = 0, fixed_abs, tag = 'sflag constant byte address 0x0 - dummy sync flag']
  #allocation24 [shape = 's32[]', space=sflag, size = 0x4, offset = 0, fixed_abs, tag = 'sflag constant byte address 0x0 - dummy sync flag']
  #allocation25 [shape = 's32[]', space=sflag, size = 0x4, offset = 0, fixed_abs, tag = 'sflag constant byte address 0x0 - dummy sync flag']
  #allocation26 [shape = 's32[]', space=sflag, size = 0x4, offset = 0, fixed_abs, tag = 'sflag constant byte address 0x0 - dummy sync flag']
  #allocation27 [shape = 's32[]', space=sflag, size = 0x4, offset = 0, fixed_abs, tag = 'sflag constant byte address 0x0 - dummy sync flag']
  #allocation28 [shape = 's32[]', space=sflag, size = 0x4, offset = 0, fixed_abs, tag = 'sflag constant byte address 0x0 - dummy sync flag']
  #allocation29 [shape = 's32[]', space=sflag, size = 0x4, offset = 0, fixed_abs, tag = 'sflag constant byte address 0x0 - dummy sync flag']
  #allocation30 [shape = 's32[]', space=sflag, size = 0x4, offset = 0, fixed_abs, tag = 'sflag constant byte address 0x0 - dummy sync flag']
  #allocation31 [shape = 's32[]', space=sflag, size = 0x4, offset = 0, fixed_abs, tag = 'sflag constant byte address 0x0 - dummy sync flag']
  #allocation32 [shape = 's32[]', space=sflag, size = 0x4, offset = 0, fixed_abs, tag = 'sflag constant byte address 0x0 - dummy sync flag']
  #allocation33 [shape = 's32[]', space=sflag, size = 0x4, offset = 0, fixed_abs, tag = 'sflag constant byte address 0x0 - dummy sync flag']
  #allocation34 [shape = 's32[]', space=sflag, size = 0x4, offset = 0, fixed_abs, tag = 'sflag constant byte address 0x0 - dummy sync flag']
  #allocation35 [shape = 's32[]', space=sflag, size = 0x4, offset = 0, fixed_abs, tag = 'sflag constant byte address 0x0 - dummy sync flag']
  #allocation36 [shape = 's32[]', space=sflag, size = 0x4, offset = 0, fixed_abs, tag = 'sflag constant byte address 0x0 - dummy sync flag']
  #allocation37 [shape = 's32[]', space=sflag, size = 0x4, offset = 0, fixed_abs, tag = 'sflag constant byte address 0x0 - dummy sync flag']
  #allocation38 [shape = 's32[]', space=sflag, size = 0x4, offset = 0, fixed_abs, tag = 'sflag constant byte address 0x0 - dummy sync flag']
  #allocation39 [shape = 's32[]', space=sflag, size = 0x4, offset = 0, fixed_abs, tag = 'sflag constant byte address 0x0 - dummy sync flag']
  #allocation40 [shape = 's32[]', space=sflag, size = 0x4, offset = 0, fixed_abs, tag = 'sflag constant byte address 0x0 - dummy sync flag']
  #allocation41 [shape = 's32[]', space=sflag, size = 0x4, offset = 0, fixed_abs, tag = 'sflag constant byte address 0x0 - dummy sync flag']
  #allocation42 [shape = 's32[]', space=sflag, size = 0x4, offset = 0, fixed_abs, tag = 'sflag constant byte address 0x0 - dummy sync flag']
  %s0 = inlined_call_operand.vmem [shape: s32[8], index: 0, kind: input, shape index: {}]
  %s1 = inlined_call_operand.vmem [shape: s32[8], index: 1, kind: input, shape index: {}]
  %s2 = inlined_call_operand.hbm [shape: f32[8,16], index: 2, kind: input, shape index: {}]
  %s3 = inlined_call_operand.vmem [shape: f32[1,16], index: 3, kind: input, shape index: {}]
  %s4 = inlined_call_operand.hbm [shape: f32[1,16], index: 4, kind: input, shape index: {}]
  %s5 = inlined_call_operand.hbm [shape: f32[16,128], index: 5, kind: input, shape index: {}]
  %s6 = inlined_call_operand.hbm [shape: f32[1,128], index: 6, kind: input, shape index: {}]
  %s7 = inlined_call_operand.hbm [shape: f32[417,128], index: 7, kind: input, shape index: {}]
  %s8 = inlined_call_operand.vmem [shape: f32[18,128], index: 8, kind: input, shape index: {}]
  %s9 = inlined_call_operand.hbm [shape: f32[8,128], index: 9, kind: output, shape index: {}]
  %s10 = sld [smem:[#allocation0]]
  $region318: #{music_encoder_forward.1} parent=0
    _
  %s12 = ssub.s32 1, %s10
  %s13 = scalar_select 0, %s12, %s10
  %s14 = sshll.u32 %s0, 4
  %s15 = int_to_ptr.vmem [resolvable:$true] %s14
  %17 = dma.vmem_to_smem %s15, 16, [#allocation6], [#allocation5]
  %s18 = sshll.u32 %s1, 4
  %s19 = int_to_ptr.vmem [resolvable:$true] %s18
  %21 = dma.vmem_to_smem %s19, 16, [#allocation7], [#allocation5]
  %22 = dma.done [#allocation5], 32
  %23 = sfence
  $region1: #{music_encoder_forward.1} parent=0
    #allocation8 [shape = 'u8[4096]{0}', space=vmem, size = 0x1000, scoped, tag = 'input window, operand 2, single buffered']
    #allocation9 [shape = 's32[1]{0}', space=sflag, size = 0x4, scoped, tag = 'scoped memory for music_encoder_forward.1']
    #allocation10 [shape = 's32[1]{0}', space=sflag, size = 0x4, scoped, tag = 'scoped memory for music_encoder_forward.1']
    #allocation11 [shape = 'u8[512]{0}', space=vmem, size = 0x400, scoped, tag = 'input window, operand 4, single buffered']
    #allocation12 [shape = 's32[1]{0}', space=sflag, size = 0x4, scoped, tag = 'scoped memory for music_encoder_forward.1']
    #allocation13 [shape = 'u8[8192]{0}', space=vmem, size = 0x2000, scoped, tag = 'input window, operand 5, single buffered']
    #allocation14 [shape = 'u8[512]{0}', space=vmem, size = 0x400, scoped, tag = 'input window, operand 6, single buffered']
    #allocation15 [shape = 's32[1]{0}', space=sflag, size = 0x4, scoped, tag = 'scoped memory for music_encoder_forward.1']
    #allocation16 [shape = 'u8[4096]{0}', space=vmem, size = 0x1000, scoped, tag = 'output window, operand 0, single buffered']
    %24 = vsyncpa [#allocation9], 0
    %25 = vsyncpa [#allocation12], 0
    %26 = vsyncpa [#allocation15], 0
    %27 = vsyncpa [#allocation10], 0
    // Predicated region
    $region2: #{music_encoder_forward.1} parent=1 // pred_check
      _
    $region3: #{music_encoder_forward.1} parent=1 // pred_check_branch
      %29 = sbr.rel (0) target = $region5
    $region4: #{music_encoder_forward.1} parent=1 // pred_region
      %s31 = ssub.s32 128, 128
      %32 = vsyncadd [#allocation9], %s31
      %s34 = sshll.u32 [#allocation8], 4
      %s35 = int_to_ptr.vmem [resolvable:$true] %s34
      %37 = dma.hbm_to_vmem [thread:$0]  %s2, 128, %s35, [#allocation9]
    $region5: #{music_encoder_forward.1} parent=1 // pred_fallthru
      _
    // Predicated region
    $region6: #{music_encoder_forward.1} parent=1 // pred_check
      _
    $region7: #{music_encoder_forward.1} parent=1 // pred_check_branch
      %39 = sbr.rel (0) target = $region9
    $region8: #{music_encoder_forward.1} parent=1 // pred_region
      _
    $region9: #{music_encoder_forward.1} parent=1 // pred_fallthru
      _
    // Predicated region
    $region10: #{music_encoder_forward.1} parent=1 // pred_check
      _
    $region11: #{music_encoder_forward.1} parent=1 // pred_check_branch
      %41 = sbr.rel (0) target = $region13
    $region12: #{music_encoder_forward.1} parent=1 // pred_region
      %s43 = ssub.s32 16, 16
      %44 = vsyncadd [#allocation12], %s43
      %s46 = sshll.u32 [#allocation11], 4
      %s47 = int_to_ptr.vmem [resolvable:$true] %s46
      %49 = dma.hbm_to_vmem [thread:$0]  %s4, 16, %s47, [#allocation12]
    $region13: #{music_encoder_forward.1} parent=1 // pred_fallthru
      _
    // Predicated region
    $region14: #{music_encoder_forward.1} parent=1 // pred_check
      _
    $region15: #{music_encoder_forward.1} parent=1 // pred_check_branch
      %51 = sbr.rel (0) target = $region17
    $region16: #{music_encoder_forward.1} parent=1 // pred_region
      %s53 = ssub.s32 256, 256
      %54 = vsyncadd [#allocation12], %s53
      %s55 = sshll.u32 [#allocation13], 4
      %s56 = int_to_ptr.vmem [resolvable:$true] %s55
      %61 = dma.hbm_to_vmem [thread:$0]  %s5, 256, %s56, [#allocation12], 128, 128, 8
    $region17: #{music_encoder_forward.1} parent=1 // pred_fallthru
      _
    // Predicated region
    $region18: #{music_encoder_forward.1} parent=1 // pred_check
      _
    $region19: #{music_encoder_forward.1} parent=1 // pred_check_branch
      %63 = sbr.rel (0) target = $region21
    $region20: #{music_encoder_forward.1} parent=1 // pred_region
      %s65 = ssub.s32 16, 16
      %66 = vsyncadd [#allocation15], %s65
      %s68 = sshll.u32 [#allocation14], 4
      %s69 = int_to_ptr.vmem [resolvable:$true] %s68
      %71 = dma.hbm_to_vmem [thread:$0]  %s6, 16, %s69, [#allocation15]
    $region21: #{music_encoder_forward.1} parent=1 // pred_fallthru
      _
    // Predicated region
    $region22: #{music_encoder_forward.1} parent=1 // pred_check
      _
    $region23: #{music_encoder_forward.1} parent=1 // pred_check_branch
      %73 = sbr.rel (0) target = $region25
    $region24: #{music_encoder_forward.1} parent=1 // pred_region
      %74 = dma.done [#allocation9], 128
    $region25: #{music_encoder_forward.1} parent=1 // pred_fallthru
      _
    // Predicated region
    $region26: #{music_encoder_forward.1} parent=1 // pred_check
      _
    $region27: #{music_encoder_forward.1} parent=1 // pred_check_branch
      %76 = sbr.rel (0) target = $region29
    $region28: #{music_encoder_forward.1} parent=1 // pred_region
      %77 = dma.done [#allocation12], 16
    $region29: #{music_encoder_forward.1} parent=1 // pred_fallthru
      _
    // Predicated region
    $region30: #{music_encoder_forward.1} parent=1 // pred_check
      _
    $region31: #{music_encoder_forward.1} parent=1 // pred_check_branch
      %79 = sbr.rel (0) target = $region33
    $region32: #{music_encoder_forward.1} parent=1 // pred_region
      %80 = dma.done [#allocation12], 256
    $region33: #{music_encoder_forward.1} parent=1 // pred_fallthru
      _
    // Predicated region
    $region34: #{music_encoder_forward.1} parent=1 // pred_check
      _
    $region35: #{music_encoder_forward.1} parent=1 // pred_check_branch
      %82 = sbr.rel (0) target = $region37
    $region36: #{music_encoder_forward.1} parent=1 // pred_region
      %83 = dma.done [#allocation15], 16
    $region37: #{music_encoder_forward.1} parent=1 // pred_fallthru
      _
    %s84 = sld [smem:[#allocation6]]
    %p85 = scmp.gt.s32.totalorder %s84, 0
    %s86 = scalar_select %p85, %s84, 0
    %p87 = scmp.lt.s32.totalorder %s86, 416
    %s88 = scalar_select %p87, %s86, 416
    %s89 = sld [smem:[#allocation7]]
    %p90 = scmp.gt.s32.totalorder %s89, 0
    %s91 = scalar_select %p90, %s89, 0
    %p92 = scmp.lt.s32.totalorder %s91, 17
    %s93 = scalar_select %p92, %s91, 17
    %s94 = smul.addr %s88, 16
    %s95 = scalar_lea.hbm %s7, %s94
    // Predicated region
    $region38: #{music_encoder_forward.1} parent=1 // pred_check
      _
    $region39: #{music_encoder_forward.1} parent=1 // pred_check_branch
      %97 = sbr.rel target = $region41
    $region40: #{music_encoder_forward.1} parent=1 // pred_region
      %98 = sst [smem:[#allocation19]] [#allocation18]
      %99 = sst [smem:[#allocation20]] [#allocation17]
    $region41: #{music_encoder_forward.1} parent=1 // pred_fallthru
      _
    %101 = shalt.err (0)
    %s103 = sshll.u32 [#allocation2], 4
    %s104 = int_to_ptr.vmem [resolvable:$true] %s103
    %106 = dma.hbm_to_vmem [thread:$0]  %s95, 16, %s104, [#allocation4]
    %s107 = scalar_lea.vmem %s8, %s93
    %s108 = scalar_lea.sflag [#allocation4], 8
    %p110 = scmp.lt.u32.totalorder 1, 8
    %p111 = pneg %p110
    // Predicated region
    $region42: #{music_encoder_forward.1} parent=1 // pred_check
      _
    $region43: #{music_encoder_forward.1} parent=1 // pred_check_branch
      %113 = sbr.rel (%p110) target = $region45
    $region44: #{music_encoder_forward.1} parent=1 // pred_region
      %s128 = sand.u32 1, 7
      %p129 = scmp.eq.s32.totalorder %s128, 0
      %p130 = pneg %p129
      // Predicated region
      $region57: #{music_encoder_forward.1} parent=44 // pred_check
        _
      $region58: #{music_encoder_forward.1} parent=44 // pred_check_branch
        %132 = sbr.rel (%p129) target = $region60
      $region59: #{music_encoder_forward.1} parent=44 // pred_region
        %s133 = sand.u32 1, 7
        %s134 = ssub.s32 1, %s133
        %s135 = scalar_lea.vmem %s107, %s134
        %s136 = ssub.s32 1, %s133
        %s137 = scalar_lea.vmem [#allocation3], %s136
        %s138 = sshllo.u32 0, %s133
        loop: start=0, step=1, limit=1
        $region61: #{music_encoder_forward.1} parent=59 // loop_pre_header
          _
        $region62: #{music_encoder_forward.1} parent=59 // loop_header
          %s140 = sphi 0, %s144
          %p141 = scmp.ge.s32.totalorder %s140, 1
          %s145 = sphi %s135, %s135
          %s146 = sphi %s137, %s137
        $region63: #{music_encoder_forward.1} parent=59 // loop_header_branch
          %143 = sbr.rel (%p141) target = $region67
        $region64: #{music_encoder_forward.1} parent=59 // loop_body
          %v147 = vld [vmem:[%s145] sm:%s138]
          %148 = vst [vmem:[%s146] sm:%s138] %v147
        $region65: #{music_encoder_forward.1} parent=59 // loop_footer
          %s144 = sadd.s32 1, %s140
        $region66: #{music_encoder_forward.1} parent=59 // loop_footer_branch
          %139 = sbr.rel target = $region62
        $region67: #{music_encoder_forward.1} parent=59 // loop_exit
          _
      $region60: #{music_encoder_forward.1} parent=44 // pred_fallthru
        _
    $region45: #{music_encoder_forward.1} parent=1 // pred_fallthru
      _
    // Predicated region
    $region46: #{music_encoder_forward.1} parent=1 // pred_check
      %p114 = pneg %p110
    $region47: #{music_encoder_forward.1} parent=1 // pred_check_branch
      %116 = sbr.rel (%p114) target = $region49
    $region48: #{music_encoder_forward.1} parent=1 // pred_region
      %s117 = sshllo.u32 0, 1
      loop: start=0, step=1, limit=1
      $region50: #{music_encoder_forward.1} parent=48 // loop_pre_header
        _
      $region51: #{music_encoder_forward.1} parent=48 // loop_header
        %s119 = sphi 0, %s123
        %p120 = scmp.ge.s32.totalorder %s119, 1
        %s124 = sphi %s107, %s107
        %s125 = sphi [#allocation3], [#allocation3]
      $region52: #{music_encoder_forward.1} parent=48 // loop_header_branch
        %122 = sbr.rel (%p120) target = $region56
      $region53: #{music_encoder_forward.1} parent=48 // loop_body
        %v126 = vld [vmem:[%s124] sm:%s117]
        %127 = vst [vmem:[%s125] sm:%s117] %v126
      $region54: #{music_encoder_forward.1} parent=48 // loop_footer
        %s123 = sadd.s32 1, %s119
      $region55: #{music_encoder_forward.1} parent=48 // loop_footer_branch
        %118 = sbr.rel target = $region51
      $region56: #{music_encoder_forward.1} parent=48 // loop_exit
        _
    $region49: #{music_encoder_forward.1} parent=1 // pred_fallthru
      _
    // Predicated region
    $region68: #{music_encoder_forward.1} parent=1 // pred_check
      _
    $region69: #{music_encoder_forward.1} parent=1 // pred_check_branch
      %151 = sbr.rel (0) target = $region71
    $region70: #{music_encoder_forward.1} parent=1 // pred_region
      %152 = vsyncadd %s108, 16
    $region71: #{music_encoder_forward.1} parent=1 // pred_fallthru
      _
    %s153 = sld [smem:[#allocation6 + $0x1]]
    %p154 = scmp.gt.s32.totalorder %s153, 0
    %s155 = scalar_select %p154, %s153, 0
    %p156 = scmp.lt.s32.totalorder %s155, 416
    %s157 = scalar_select %p156, %s155, 416
    %s158 = sld [smem:[#allocation7 + $0x1]]
    %p159 = scmp.gt.s32.totalorder %s158, 0
    %s160 = scalar_select %p159, %s158, 0
    %p161 = scmp.lt.s32.totalorder %s160, 17
    %s162 = scalar_select %p161, %s160, 17
    %s163 = smul.addr %s157, 16
    %s164 = scalar_lea.hbm %s7, %s163
    %s165 = scalar_lea.vmem [#allocation2], 1
    %s166 = scalar_lea.sflag [#allocation4], 1
    // Predicated region
    $region72: #{music_encoder_forward.1} parent=1 // pred_check
      _
    $region73: #{music_encoder_forward.1} parent=1 // pred_check_branch
      %168 = sbr.rel target = $region75
    $region74: #{music_encoder_forward.1} parent=1 // pred_region
      %169 = sst [smem:[#allocation19]] [#allocation23]
      %170 = sst [smem:[#allocation20]] [#allocation22]
    $region75: #{music_encoder_forward.1} parent=1 // pred_fallthru
      _
    %172 = shalt.err (0)
    %s174 = sshll.u32 %s165, 4
    %s175 = int_to_ptr.vmem [resolvable:$true] %s174
    %177 = dma.hbm_to_vmem [thread:$0]  %s164, 16, %s175, %s166
    %s178 = scalar_lea.vmem %s8, %s162
    %s179 = scalar_lea.vmem [#allocation3], 1
    %s180 = scalar_lea.sflag [#allocation4], 9
    %p182 = scmp.lt.u32.totalorder 1, 8
    %p183 = pneg %p182
    // Predicated region
    $region76: #{music_encoder_forward.1} parent=1 // pred_check
      _
    $region77: #{music_encoder_forward.1} parent=1 // pred_check_branch
      %185 = sbr.rel (%p182) target = $region79
    $region78: #{music_encoder_forward.1} parent=1 // pred_region
      %s200 = sand.u32 1, 7
      %p201 = scmp.eq.s32.totalorder %s200, 0
      %p202 = pneg %p201
      // Predicated region
      $region91: #{music_encoder_forward.1} parent=78 // pred_check
        _
      $region92: #{music_encoder_forward.1} parent=78 // pred_check_branch
        %204 = sbr.rel (%p201) target = $region94
      $region93: #{music_encoder_forward.1} parent=78 // pred_region
        %s205 = sand.u32 1, 7
        %s206 = ssub.s32 1, %s205
        %s207 = scalar_lea.vmem %s178, %s206
        %s208 = ssub.s32 1, %s205
        %s209 = scalar_lea.vmem %s179, %s208 [#allocation3]
        %s210 = sshllo.u32 0, %s205
        loop: start=0, step=1, limit=1
        $region95: #{music_encoder_forward.1} parent=93 // loop_pre_header
          _
        $region96: #{music_encoder_forward.1} parent=93 // loop_header
          %s212 = sphi 0, %s216
          %p213 = scmp.ge.s32.totalorder %s212, 1
          %s217 = sphi %s207, %s207
          %s218 = sphi %s209, %s209
        $region97: #{music_encoder_forward.1} parent=93 // loop_header_branch
          %215 = sbr.rel (%p213) target = $region101
        $region98: #{music_encoder_forward.1} parent=93 // loop_body
          %v219 = vld [vmem:[%s217] sm:%s210]
          %220 = vst [vmem:[%s218] sm:%s210] %v219
        $region99: #{music_encoder_forward.1} parent=93 // loop_footer
          %s216 = sadd.s32 1, %s212
        $region100: #{music_encoder_forward.1} parent=93 // loop_footer_branch
          %211 = sbr.rel target = $region96
        $region101: #{music_encoder_forward.1} parent=93 // loop_exit
          _
      $region94: #{music_encoder_forward.1} parent=78 // pred_fallthru
        _
    $region79: #{music_encoder_forward.1} parent=1 // pred_fallthru
      _
    // Predicated region
    $region80: #{music_encoder_forward.1} parent=1 // pred_check
      %p186 = pneg %p182
    $region81: #{music_encoder_forward.1} parent=1 // pred_check_branch
      %188 = sbr.rel (%p186) target = $region83
    $region82: #{music_encoder_forward.1} parent=1 // pred_region
      %s189 = sshllo.u32 0, 1
      loop: start=0, step=1, limit=1
      $region84: #{music_encoder_forward.1} parent=82 // loop_pre_header
        _
      $region85: #{music_encoder_forward.1} parent=82 // loop_header
        %s191 = sphi 0, %s195
        %p192 = scmp.ge.s32.totalorder %s191, 1
        %s196 = sphi %s178, %s178
        %s197 = sphi %s179, %s179
      $region86: #{music_encoder_forward.1} parent=82 // loop_header_branch
        %194 = sbr.rel (%p192) target = $region90
      $region87: #{music_encoder_forward.1} parent=82 // loop_body
        %v198 = vld [vmem:[%s196] sm:%s189]
        %199 = vst [vmem:[%s197] sm:%s189] %v198
      $region88: #{music_encoder_forward.1} parent=82 // loop_footer
        %s195 = sadd.s32 1, %s191
      $region89: #{music_encoder_forward.1} parent=82 // loop_footer_branch
        %190 = sbr.rel target = $region85
      $region90: #{music_encoder_forward.1} parent=82 // loop_exit
        _
    $region83: #{music_encoder_forward.1} parent=1 // pred_fallthru
      _
    // Predicated region
    $region102: #{music_encoder_forward.1} parent=1 // pred_check
      _
    $region103: #{music_encoder_forward.1} parent=1 // pred_check_branch
      %223 = sbr.rel (0) target = $region105
    $region104: #{music_encoder_forward.1} parent=1 // pred_region
      %224 = vsyncadd %s180, 16
    $region105: #{music_encoder_forward.1} parent=1 // pred_fallthru
      _
    %s225 = sld [smem:[#allocation6 + $0x2]]
    %p226 = scmp.gt.s32.totalorder %s225, 0
    %s227 = scalar_select %p226, %s225, 0
    %p228 = scmp.lt.s32.totalorder %s227, 416
    %s229 = scalar_select %p228, %s227, 416
    %s230 = sld [smem:[#allocation7 + $0x2]]
    %p231 = scmp.gt.s32.totalorder %s230, 0
    %s232 = scalar_select %p231, %s230, 0
    %p233 = scmp.lt.s32.totalorder %s232, 17
    %s234 = scalar_select %p233, %s232, 17
    %s235 = smul.addr %s229, 16
    %s236 = scalar_lea.hbm %s7, %s235
    %s237 = scalar_lea.vmem [#allocation2], 2
    %s238 = scalar_lea.sflag [#allocation4], 2
    // Predicated region
    $region106: #{music_encoder_forward.1} parent=1 // pred_check
      _
    $region107: #{music_encoder_forward.1} parent=1 // pred_check_branch
      %240 = sbr.rel target = $region109
    $region108: #{music_encoder_forward.1} parent=1 // pred_region
      %241 = sst [smem:[#allocation19]] [#allocation26]
      %242 = sst [smem:[#allocation20]] [#allocation25]
    $region109: #{music_encoder_forward.1} parent=1 // pred_fallthru
      _
    %244 = shalt.err (0)
    %s246 = sshll.u32 %s237, 4
    %s247 = int_to_ptr.vmem [resolvable:$true] %s246
    %249 = dma.hbm_to_vmem [thread:$0]  %s236, 16, %s247, %s238
    %s250 = scalar_lea.vmem %s8, %s234
    %s251 = scalar_lea.vmem [#allocation3], 2
    %s252 = scalar_lea.sflag [#allocation4], 10
    %p254 = scmp.lt.u32.totalorder 1, 8
    %p255 = pneg %p254
    // Predicated region
    $region110: #{music_encoder_forward.1} parent=1 // pred_check
      _
    $region111: #{music_encoder_forward.1} parent=1 // pred_check_branch
      %257 = sbr.rel (%p254) target = $region113
    $region112: #{music_encoder_forward.1} parent=1 // pred_region
      %s272 = sand.u32 1, 7
      %p273 = scmp.eq.s32.totalorder %s272, 0
      %p274 = pneg %p273
      // Predicated region
      $region125: #{music_encoder_forward.1} parent=112 // pred_check
        _
      $region126: #{music_encoder_forward.1} parent=112 // pred_check_branch
        %276 = sbr.rel (%p273) target = $region128
      $region127: #{music_encoder_forward.1} parent=112 // pred_region
        %s277 = sand.u32 1, 7
        %s278 = ssub.s32 1, %s277
        %s279 = scalar_lea.vmem %s250, %s278
        %s280 = ssub.s32 1, %s277
        %s281 = scalar_lea.vmem %s251, %s280 [#allocation3]
        %s282 = sshllo.u32 0, %s277
        loop: start=0, step=1, limit=1
        $region129: #{music_encoder_forward.1} parent=127 // loop_pre_header
          _
        $region130: #{music_encoder_forward.1} parent=127 // loop_header
          %s284 = sphi 0, %s288
          %p285 = scmp.ge.s32.totalorder %s284, 1
          %s289 = sphi %s279, %s279
          %s290 = sphi %s281, %s281
        $region131: #{music_encoder_forward.1} parent=127 // loop_header_branch
          %287 = sbr.rel (%p285) target = $region135
        $region132: #{music_encoder_forward.1} parent=127 // loop_body
          %v291 = vld [vmem:[%s289] sm:%s282]
          %292 = vst [vmem:[%s290] sm:%s282] %v291
        $region133: #{music_encoder_forward.1} parent=127 // loop_footer
          %s288 = sadd.s32 1, %s284
        $region134: #{music_encoder_forward.1} parent=127 // loop_footer_branch
          %283 = sbr.rel target = $region130
        $region135: #{music_encoder_forward.1} parent=127 // loop_exit
          _
      $region128: #{music_encoder_forward.1} parent=112 // pred_fallthru
        _
    $region113: #{music_encoder_forward.1} parent=1 // pred_fallthru
      _
    // Predicated region
    $region114: #{music_encoder_forward.1} parent=1 // pred_check
      %p258 = pneg %p254
    $region115: #{music_encoder_forward.1} parent=1 // pred_check_branch
      %260 = sbr.rel (%p258) target = $region117
    $region116: #{music_encoder_forward.1} parent=1 // pred_region
      %s261 = sshllo.u32 0, 1
      loop: start=0, step=1, limit=1
      $region118: #{music_encoder_forward.1} parent=116 // loop_pre_header
        _
      $region119: #{music_encoder_forward.1} parent=116 // loop_header
        %s263 = sphi 0, %s267
        %p264 = scmp.ge.s32.totalorder %s263, 1
        %s268 = sphi %s250, %s250
        %s269 = sphi %s251, %s251
      $region120: #{music_encoder_forward.1} parent=116 // loop_header_branch
        %266 = sbr.rel (%p264) target = $region124
      $region121: #{music_encoder_forward.1} parent=116 // loop_body
        %v270 = vld [vmem:[%s268] sm:%s261]
        %271 = vst [vmem:[%s269] sm:%s261] %v270
      $region122: #{music_encoder_forward.1} parent=116 // loop_footer
        %s267 = sadd.s32 1, %s263
      $region123: #{music_encoder_forward.1} parent=116 // loop_footer_branch
        %262 = sbr.rel target = $region119
      $region124: #{music_encoder_forward.1} parent=116 // loop_exit
        _
    $region117: #{music_encoder_forward.1} parent=1 // pred_fallthru
      _
    // Predicated region
    $region136: #{music_encoder_forward.1} parent=1 // pred_check
      _
    $region137: #{music_encoder_forward.1} parent=1 // pred_check_branch
      %295 = sbr.rel (0) target = $region139
    $region138: #{music_encoder_forward.1} parent=1 // pred_region
      %296 = vsyncadd %s252, 16
    $region139: #{music_encoder_forward.1} parent=1 // pred_fallthru
      _
    %s297 = sld [smem:[#allocation6 + $0x3]]
    %p298 = scmp.gt.s32.totalorder %s297, 0
    %s299 = scalar_select %p298, %s297, 0
    %p300 = scmp.lt.s32.totalorder %s299, 416
    %s301 = scalar_select %p300, %s299, 416
    %s302 = sld [smem:[#allocation7 + $0x3]]
    %p303 = scmp.gt.s32.totalorder %s302, 0
    %s304 = scalar_select %p303, %s302, 0
    %p305 = scmp.lt.s32.totalorder %s304, 17
    %s306 = scalar_select %p305, %s304, 17
    %s307 = smul.addr %s301, 16
    %s308 = scalar_lea.hbm %s7, %s307
    %s309 = scalar_lea.vmem [#allocation2], 3
    %s310 = scalar_lea.sflag [#allocation4], 3
    // Predicated region
    $region140: #{music_encoder_forward.1} parent=1 // pred_check
      _
    $region141: #{music_encoder_forward.1} parent=1 // pred_check_branch
      %312 = sbr.rel target = $region143
    $region142: #{music_encoder_forward.1} parent=1 // pred_region
      %313 = sst [smem:[#allocation19]] [#allocation29]
      %314 = sst [smem:[#allocation20]] [#allocation28]
    $region143: #{music_encoder_forward.1} parent=1 // pred_fallthru
      _
    %316 = shalt.err (0)
    %s318 = sshll.u32 %s309, 4
    %s319 = int_to_ptr.vmem [resolvable:$true] %s318
    %321 = dma.hbm_to_vmem [thread:$0]  %s308, 16, %s319, %s310
    %s322 = scalar_lea.vmem %s8, %s306
    %s323 = scalar_lea.vmem [#allocation3], 3
    %s324 = scalar_lea.sflag [#allocation4], 11
    %p326 = scmp.lt.u32.totalorder 1, 8
    %p327 = pneg %p326
    // Predicated region
    $region144: #{music_encoder_forward.1} parent=1 // pred_check
      _
    $region145: #{music_encoder_forward.1} parent=1 // pred_check_branch
      %329 = sbr.rel (%p326) target = $region147
    $region146: #{music_encoder_forward.1} parent=1 // pred_region
      %s344 = sand.u32 1, 7
      %p345 = scmp.eq.s32.totalorder %s344, 0
      %p346 = pneg %p345
      // Predicated region
      $region159: #{music_encoder_forward.1} parent=146 // pred_check
        _
      $region160: #{music_encoder_forward.1} parent=146 // pred_check_branch
        %348 = sbr.rel (%p345) target = $region162
      $region161: #{music_encoder_forward.1} parent=146 // pred_region
        %s349 = sand.u32 1, 7
        %s350 = ssub.s32 1, %s349
        %s351 = scalar_lea.vmem %s322, %s350
        %s352 = ssub.s32 1, %s349
        %s353 = scalar_lea.vmem %s323, %s352 [#allocation3]
        %s354 = sshllo.u32 0, %s349
        loop: start=0, step=1, limit=1
        $region163: #{music_encoder_forward.1} parent=161 // loop_pre_header
          _
        $region164: #{music_encoder_forward.1} parent=161 // loop_header
          %s356 = sphi 0, %s360
          %p357 = scmp.ge.s32.totalorder %s356, 1
          %s361 = sphi %s351, %s351
          %s362 = sphi %s353, %s353
        $region165: #{music_encoder_forward.1} parent=161 // loop_header_branch
          %359 = sbr.rel (%p357) target = $region169
        $region166: #{music_encoder_forward.1} parent=161 // loop_body
          %v363 = vld [vmem:[%s361] sm:%s354]
          %364 = vst [vmem:[%s362] sm:%s354] %v363
        $region167: #{music_encoder_forward.1} parent=161 // loop_footer
          %s360 = sadd.s32 1, %s356
        $region168: #{music_encoder_forward.1} parent=161 // loop_footer_branch
          %355 = sbr.rel target = $region164
        $region169: #{music_encoder_forward.1} parent=161 // loop_exit
          _
      $region162: #{music_encoder_forward.1} parent=146 // pred_fallthru
        _
    $region147: #{music_encoder_forward.1} parent=1 // pred_fallthru
      _
    // Predicated region
    $region148: #{music_encoder_forward.1} parent=1 // pred_check
      %p330 = pneg %p326
    $region149: #{music_encoder_forward.1} parent=1 // pred_check_branch
      %332 = sbr.rel (%p330) target = $region151
    $region150: #{music_encoder_forward.1} parent=1 // pred_region
      %s333 = sshllo.u32 0, 1
      loop: start=0, step=1, limit=1
      $region152: #{music_encoder_forward.1} parent=150 // loop_pre_header
        _
      $region153: #{music_encoder_forward.1} parent=150 // loop_header
        %s335 = sphi 0, %s339
        %p336 = scmp.ge.s32.totalorder %s335, 1
        %s340 = sphi %s322, %s322
        %s341 = sphi %s323, %s323
      $region154: #{music_encoder_forward.1} parent=150 // loop_header_branch
        %338 = sbr.rel (%p336) target = $region158
      $region155: #{music_encoder_forward.1} parent=150 // loop_body
        %v342 = vld [vmem:[%s340] sm:%s333]
        %343 = vst [vmem:[%s341] sm:%s333] %v342
      $region156: #{music_encoder_forward.1} parent=150 // loop_footer
        %s339 = sadd.s32 1, %s335
      $region157: #{music_encoder_forward.1} parent=150 // loop_footer_branch
        %334 = sbr.rel target = $region153
      $region158: #{music_encoder_forward.1} parent=150 // loop_exit
        _
    $region151: #{music_encoder_forward.1} parent=1 // pred_fallthru
      _
    // Predicated region
    $region170: #{music_encoder_forward.1} parent=1 // pred_check
      _
    $region171: #{music_encoder_forward.1} parent=1 // pred_check_branch
      %367 = sbr.rel (0) target = $region173
    $region172: #{music_encoder_forward.1} parent=1 // pred_region
      %368 = vsyncadd %s324, 16
    $region173: #{music_encoder_forward.1} parent=1 // pred_fallthru
      _
    %s369 = sld [smem:[#allocation6 + $0x4]]
    %p370 = scmp.gt.s32.totalorder %s369, 0
    %s371 = scalar_select %p370, %s369, 0
    %p372 = scmp.lt.s32.totalorder %s371, 416
    %s373 = scalar_select %p372, %s371, 416
    %s374 = sld [smem:[#allocation7 + $0x4]]
    %p375 = scmp.gt.s32.totalorder %s374, 0
    %s376 = scalar_select %p375, %s374, 0
    %p377 = scmp.lt.s32.totalorder %s376, 17
    %s378 = scalar_select %p377, %s376, 17
    %s379 = smul.addr %s373, 16
    %s380 = scalar_lea.hbm %s7, %s379
    %s381 = scalar_lea.vmem [#allocation2], 4
    %s382 = scalar_lea.sflag [#allocation4], 4
    // Predicated region
    $region174: #{music_encoder_forward.1} parent=1 // pred_check
      _
    $region175: #{music_encoder_forward.1} parent=1 // pred_check_branch
      %384 = sbr.rel target = $region177
    $region176: #{music_encoder_forward.1} parent=1 // pred_region
      %385 = sst [smem:[#allocation19]] [#allocation32]
      %386 = sst [smem:[#allocation20]] [#allocation31]
    $region177: #{music_encoder_forward.1} parent=1 // pred_fallthru
      _
    %388 = shalt.err (0)
    %s390 = sshll.u32 %s381, 4
    %s391 = int_to_ptr.vmem [resolvable:$true] %s390
    %393 = dma.hbm_to_vmem [thread:$0]  %s380, 16, %s391, %s382
    %s394 = scalar_lea.vmem %s8, %s378
    %s395 = scalar_lea.vmem [#allocation3], 4
    %s396 = scalar_lea.sflag [#allocation4], 12
    %p398 = scmp.lt.u32.totalorder 1, 8
    %p399 = pneg %p398
    // Predicated region
    $region178: #{music_encoder_forward.1} parent=1 // pred_check
      _
    $region179: #{music_encoder_forward.1} parent=1 // pred_check_branch
      %401 = sbr.rel (%p398) target = $region181
    $region180: #{music_encoder_forward.1} parent=1 // pred_region
      %s416 = sand.u32 1, 7
      %p417 = scmp.eq.s32.totalorder %s416, 0
      %p418 = pneg %p417
      // Predicated region
      $region193: #{music_encoder_forward.1} parent=180 // pred_check
        _
      $region194: #{music_encoder_forward.1} parent=180 // pred_check_branch
        %420 = sbr.rel (%p417) target = $region196
      $region195: #{music_encoder_forward.1} parent=180 // pred_region
        %s421 = sand.u32 1, 7
        %s422 = ssub.s32 1, %s421
        %s423 = scalar_lea.vmem %s394, %s422
        %s424 = ssub.s32 1, %s421
        %s425 = scalar_lea.vmem %s395, %s424 [#allocation3]
        %s426 = sshllo.u32 0, %s421
        loop: start=0, step=1, limit=1
        $region197: #{music_encoder_forward.1} parent=195 // loop_pre_header
          _
        $region198: #{music_encoder_forward.1} parent=195 // loop_header
          %s428 = sphi 0, %s432
          %p429 = scmp.ge.s32.totalorder %s428, 1
          %s433 = sphi %s423, %s423
          %s434 = sphi %s425, %s425
        $region199: #{music_encoder_forward.1} parent=195 // loop_header_branch
          %431 = sbr.rel (%p429) target = $region203
        $region200: #{music_encoder_forward.1} parent=195 // loop_body
          %v435 = vld [vmem:[%s433] sm:%s426]
          %436 = vst [vmem:[%s434] sm:%s426] %v435
        $region201: #{music_encoder_forward.1} parent=195 // loop_footer
          %s432 = sadd.s32 1, %s428
        $region202: #{music_encoder_forward.1} parent=195 // loop_footer_branch
          %427 = sbr.rel target = $region198
        $region203: #{music_encoder_forward.1} parent=195 // loop_exit
          _
      $region196: #{music_encoder_forward.1} parent=180 // pred_fallthru
        _
    $region181: #{music_encoder_forward.1} parent=1 // pred_fallthru
      _
    // Predicated region
    $region182: #{music_encoder_forward.1} parent=1 // pred_check
      %p402 = pneg %p398
    $region183: #{music_encoder_forward.1} parent=1 // pred_check_branch
      %404 = sbr.rel (%p402) target = $region185
    $region184: #{music_encoder_forward.1} parent=1 // pred_region
      %s405 = sshllo.u32 0, 1
      loop: start=0, step=1, limit=1
      $region186: #{music_encoder_forward.1} parent=184 // loop_pre_header
        _
      $region187: #{music_encoder_forward.1} parent=184 // loop_header
        %s407 = sphi 0, %s411
        %p408 = scmp.ge.s32.totalorder %s407, 1
        %s412 = sphi %s394, %s394
        %s413 = sphi %s395, %s395
      $region188: #{music_encoder_forward.1} parent=184 // loop_header_branch
        %410 = sbr.rel (%p408) target = $region192
      $region189: #{music_encoder_forward.1} parent=184 // loop_body
        %v414 = vld [vmem:[%s412] sm:%s405]
        %415 = vst [vmem:[%s413] sm:%s405] %v414
      $region190: #{music_encoder_forward.1} parent=184 // loop_footer
        %s411 = sadd.s32 1, %s407
      $region191: #{music_encoder_forward.1} parent=184 // loop_footer_branch
        %406 = sbr.rel target = $region187
      $region192: #{music_encoder_forward.1} parent=184 // loop_exit
        _
    $region185: #{music_encoder_forward.1} parent=1 // pred_fallthru
      _
    // Predicated region
    $region204: #{music_encoder_forward.1} parent=1 // pred_check
      _
    $region205: #{music_encoder_forward.1} parent=1 // pred_check_branch
      %439 = sbr.rel (0) target = $region207
    $region206: #{music_encoder_forward.1} parent=1 // pred_region
      %440 = vsyncadd %s396, 16
    $region207: #{music_encoder_forward.1} parent=1 // pred_fallthru
      _
    %s441 = sld [smem:[#allocation6 + $0x5]]
    %p442 = scmp.gt.s32.totalorder %s441, 0
    %s443 = scalar_select %p442, %s441, 0
    %p444 = scmp.lt.s32.totalorder %s443, 416
    %s445 = scalar_select %p444, %s443, 416
    %s446 = sld [smem:[#allocation7 + $0x5]]
    %p447 = scmp.gt.s32.totalorder %s446, 0
    %s448 = scalar_select %p447, %s446, 0
    %p449 = scmp.lt.s32.totalorder %s448, 17
    %s450 = scalar_select %p449, %s448, 17
    %s451 = smul.addr %s445, 16
    %s452 = scalar_lea.hbm %s7, %s451
    %s453 = scalar_lea.vmem [#allocation2], 5
    %s454 = scalar_lea.sflag [#allocation4], 5
    // Predicated region
    $region208: #{music_encoder_forward.1} parent=1 // pred_check
      _
    $region209: #{music_encoder_forward.1} parent=1 // pred_check_branch
      %456 = sbr.rel target = $region211
    $region210: #{music_encoder_forward.1} parent=1 // pred_region
      %457 = sst [smem:[#allocation19]] [#allocation35]
      %458 = sst [smem:[#allocation20]] [#allocation34]
    $region211: #{music_encoder_forward.1} parent=1 // pred_fallthru
      _
    %460 = shalt.err (0)
    %s462 = sshll.u32 %s453, 4
    %s463 = int_to_ptr.vmem [resolvable:$true] %s462
    %465 = dma.hbm_to_vmem [thread:$0]  %s452, 16, %s463, %s454
    %s466 = scalar_lea.vmem %s8, %s450
    %s467 = scalar_lea.vmem [#allocation3], 5
    %s468 = scalar_lea.sflag [#allocation4], 13
    %p470 = scmp.lt.u32.totalorder 1, 8
    %p471 = pneg %p470
    // Predicated region
    $region212: #{music_encoder_forward.1} parent=1 // pred_check
      _
    $region213: #{music_encoder_forward.1} parent=1 // pred_check_branch
      %473 = sbr.rel (%p470) target = $region215
    $region214: #{music_encoder_forward.1} parent=1 // pred_region
      %s488 = sand.u32 1, 7
      %p489 = scmp.eq.s32.totalorder %s488, 0
      %p490 = pneg %p489
      // Predicated region
      $region227: #{music_encoder_forward.1} parent=214 // pred_check
        _
      $region228: #{music_encoder_forward.1} parent=214 // pred_check_branch
        %492 = sbr.rel (%p489) target = $region230
      $region229: #{music_encoder_forward.1} parent=214 // pred_region
        %s493 = sand.u32 1, 7
        %s494 = ssub.s32 1, %s493
        %s495 = scalar_lea.vmem %s466, %s494
        %s496 = ssub.s32 1, %s493
        %s497 = scalar_lea.vmem %s467, %s496 [#allocation3]
        %s498 = sshllo.u32 0, %s493
        loop: start=0, step=1, limit=1
        $region231: #{music_encoder_forward.1} parent=229 // loop_pre_header
          _
        $region232: #{music_encoder_forward.1} parent=229 // loop_header
          %s500 = sphi 0, %s504
          %p501 = scmp.ge.s32.totalorder %s500, 1
          %s505 = sphi %s495, %s495
          %s506 = sphi %s497, %s497
        $region233: #{music_encoder_forward.1} parent=229 // loop_header_branch
          %503 = sbr.rel (%p501) target = $region237
        $region234: #{music_encoder_forward.1} parent=229 // loop_body
          %v507 = vld [vmem:[%s505] sm:%s498]
          %508 = vst [vmem:[%s506] sm:%s498] %v507
        $region235: #{music_encoder_forward.1} parent=229 // loop_footer
          %s504 = sadd.s32 1, %s500
        $region236: #{music_encoder_forward.1} parent=229 // loop_footer_branch
          %499 = sbr.rel target = $region232
        $region237: #{music_encoder_forward.1} parent=229 // loop_exit
          _
      $region230: #{music_encoder_forward.1} parent=214 // pred_fallthru
        _
    $region215: #{music_encoder_forward.1} parent=1 // pred_fallthru
      _
    // Predicated region
    $region216: #{music_encoder_forward.1} parent=1 // pred_check
      %p474 = pneg %p470
    $region217: #{music_encoder_forward.1} parent=1 // pred_check_branch
      %476 = sbr.rel (%p474) target = $region219
    $region218: #{music_encoder_forward.1} parent=1 // pred_region
      %s477 = sshllo.u32 0, 1
      loop: start=0, step=1, limit=1
      $region220: #{music_encoder_forward.1} parent=218 // loop_pre_header
        _
      $region221: #{music_encoder_forward.1} parent=218 // loop_header
        %s479 = sphi 0, %s483
        %p480 = scmp.ge.s32.totalorder %s479, 1
        %s484 = sphi %s466, %s466
        %s485 = sphi %s467, %s467
      $region222: #{music_encoder_forward.1} parent=218 // loop_header_branch
        %482 = sbr.rel (%p480) target = $region226
      $region223: #{music_encoder_forward.1} parent=218 // loop_body
        %v486 = vld [vmem:[%s484] sm:%s477]
        %487 = vst [vmem:[%s485] sm:%s477] %v486
      $region224: #{music_encoder_forward.1} parent=218 // loop_footer
        %s483 = sadd.s32 1, %s479
      $region225: #{music_encoder_forward.1} parent=218 // loop_footer_branch
        %478 = sbr.rel target = $region221
      $region226: #{music_encoder_forward.1} parent=218 // loop_exit
        _
    $region219: #{music_encoder_forward.1} parent=1 // pred_fallthru
      _
    // Predicated region
    $region238: #{music_encoder_forward.1} parent=1 // pred_check
      _
    $region239: #{music_encoder_forward.1} parent=1 // pred_check_branch
      %511 = sbr.rel (0) target = $region241
    $region240: #{music_encoder_forward.1} parent=1 // pred_region
      %512 = vsyncadd %s468, 16
    $region241: #{music_encoder_forward.1} parent=1 // pred_fallthru
      _
    %s513 = sld [smem:[#allocation6 + $0x6]]
    %p514 = scmp.gt.s32.totalorder %s513, 0
    %s515 = scalar_select %p514, %s513, 0
    %p516 = scmp.lt.s32.totalorder %s515, 416
    %s517 = scalar_select %p516, %s515, 416
    %s518 = sld [smem:[#allocation7 + $0x6]]
    %p519 = scmp.gt.s32.totalorder %s518, 0
    %s520 = scalar_select %p519, %s518, 0
    %p521 = scmp.lt.s32.totalorder %s520, 17
    %s522 = scalar_select %p521, %s520, 17
    %s523 = smul.addr %s517, 16
    %s524 = scalar_lea.hbm %s7, %s523
    %s525 = scalar_lea.vmem [#allocation2], 6
    %s526 = scalar_lea.sflag [#allocation4], 6
    // Predicated region
    $region242: #{music_encoder_forward.1} parent=1 // pred_check
      _
    $region243: #{music_encoder_forward.1} parent=1 // pred_check_branch
      %528 = sbr.rel target = $region245
    $region244: #{music_encoder_forward.1} parent=1 // pred_region
      %529 = sst [smem:[#allocation19]] [#allocation38]
      %530 = sst [smem:[#allocation20]] [#allocation37]
    $region245: #{music_encoder_forward.1} parent=1 // pred_fallthru
      _
    %532 = shalt.err (0)
    %s534 = sshll.u32 %s525, 4
    %s535 = int_to_ptr.vmem [resolvable:$true] %s534
    %537 = dma.hbm_to_vmem [thread:$0]  %s524, 16, %s535, %s526
    %s538 = scalar_lea.vmem %s8, %s522
    %s539 = scalar_lea.vmem [#allocation3], 6
    %s540 = scalar_lea.sflag [#allocation4], 14
    %p542 = scmp.lt.u32.totalorder 1, 8
    %p543 = pneg %p542
    // Predicated region
    $region246: #{music_encoder_forward.1} parent=1 // pred_check
      _
    $region247: #{music_encoder_forward.1} parent=1 // pred_check_branch
      %545 = sbr.rel (%p542) target = $region249
    $region248: #{music_encoder_forward.1} parent=1 // pred_region
      %s560 = sand.u32 1, 7
      %p561 = scmp.eq.s32.totalorder %s560, 0
      %p562 = pneg %p561
      // Predicated region
      $region261: #{music_encoder_forward.1} parent=248 // pred_check
        _
      $region262: #{music_encoder_forward.1} parent=248 // pred_check_branch
        %564 = sbr.rel (%p561) target = $region264
      $region263: #{music_encoder_forward.1} parent=248 // pred_region
        %s565 = sand.u32 1, 7
        %s566 = ssub.s32 1, %s565
        %s567 = scalar_lea.vmem %s538, %s566
        %s568 = ssub.s32 1, %s565
        %s569 = scalar_lea.vmem %s539, %s568 [#allocation3]
        %s570 = sshllo.u32 0, %s565
        loop: start=0, step=1, limit=1
        $region265: #{music_encoder_forward.1} parent=263 // loop_pre_header
          _
        $region266: #{music_encoder_forward.1} parent=263 // loop_header
          %s572 = sphi 0, %s576
          %p573 = scmp.ge.s32.totalorder %s572, 1
          %s577 = sphi %s567, %s567
          %s578 = sphi %s569, %s569
        $region267: #{music_encoder_forward.1} parent=263 // loop_header_branch
          %575 = sbr.rel (%p573) target = $region271
        $region268: #{music_encoder_forward.1} parent=263 // loop_body
          %v579 = vld [vmem:[%s577] sm:%s570]
          %580 = vst [vmem:[%s578] sm:%s570] %v579
        $region269: #{music_encoder_forward.1} parent=263 // loop_footer
          %s576 = sadd.s32 1, %s572
        $region270: #{music_encoder_forward.1} parent=263 // loop_footer_branch
          %571 = sbr.rel target = $region266
        $region271: #{music_encoder_forward.1} parent=263 // loop_exit
          _
      $region264: #{music_encoder_forward.1} parent=248 // pred_fallthru
        _
    $region249: #{music_encoder_forward.1} parent=1 // pred_fallthru
      _
    // Predicated region
    $region250: #{music_encoder_forward.1} parent=1 // pred_check
      %p546 = pneg %p542
    $region251: #{music_encoder_forward.1} parent=1 // pred_check_branch
      %548 = sbr.rel (%p546) target = $region253
    $region252: #{music_encoder_forward.1} parent=1 // pred_region
      %s549 = sshllo.u32 0, 1
      loop: start=0, step=1, limit=1
      $region254: #{music_encoder_forward.1} parent=252 // loop_pre_header
        _
      $region255: #{music_encoder_forward.1} parent=252 // loop_header
        %s551 = sphi 0, %s555
        %p552 = scmp.ge.s32.totalorder %s551, 1
        %s556 = sphi %s538, %s538
        %s557 = sphi %s539, %s539
      $region256: #{music_encoder_forward.1} parent=252 // loop_header_branch
        %554 = sbr.rel (%p552) target = $region260
      $region257: #{music_encoder_forward.1} parent=252 // loop_body
        %v558 = vld [vmem:[%s556] sm:%s549]
        %559 = vst [vmem:[%s557] sm:%s549] %v558
      $region258: #{music_encoder_forward.1} parent=252 // loop_footer
        %s555 = sadd.s32 1, %s551
      $region259: #{music_encoder_forward.1} parent=252 // loop_footer_branch
        %550 = sbr.rel target = $region255
      $region260: #{music_encoder_forward.1} parent=252 // loop_exit
        _
    $region253: #{music_encoder_forward.1} parent=1 // pred_fallthru
      _
    // Predicated region
    $region272: #{music_encoder_forward.1} parent=1 // pred_check
      _
    $region273: #{music_encoder_forward.1} parent=1 // pred_check_branch
      %583 = sbr.rel (0) target = $region275
    $region274: #{music_encoder_forward.1} parent=1 // pred_region
      %584 = vsyncadd %s540, 16
    $region275: #{music_encoder_forward.1} parent=1 // pred_fallthru
      _
    %s585 = sld [smem:[#allocation6 + $0x7]]
    %p586 = scmp.gt.s32.totalorder %s585, 0
    %s587 = scalar_select %p586, %s585, 0
    %p588 = scmp.lt.s32.totalorder %s587, 416
    %s589 = scalar_select %p588, %s587, 416
    %s590 = sld [smem:[#allocation7 + $0x7]]
    %p591 = scmp.gt.s32.totalorder %s590, 0
    %s592 = scalar_select %p591, %s590, 0
    %p593 = scmp.lt.s32.totalorder %s592, 17
    %s594 = scalar_select %p593, %s592, 17
    %s595 = smul.addr %s589, 16
    %s596 = scalar_lea.hbm %s7, %s595
    %s597 = scalar_lea.vmem [#allocation2], 7
    %s598 = scalar_lea.sflag [#allocation4], 7
    // Predicated region
    $region276: #{music_encoder_forward.1} parent=1 // pred_check
      _
    $region277: #{music_encoder_forward.1} parent=1 // pred_check_branch
      %600 = sbr.rel target = $region279
    $region278: #{music_encoder_forward.1} parent=1 // pred_region
      %601 = sst [smem:[#allocation19]] [#allocation41]
      %602 = sst [smem:[#allocation20]] [#allocation40]
    $region279: #{music_encoder_forward.1} parent=1 // pred_fallthru
      _
    %604 = shalt.err (0)
    %s606 = sshll.u32 %s597, 4
    %s607 = int_to_ptr.vmem [resolvable:$true] %s606
    %609 = dma.hbm_to_vmem [thread:$0]  %s596, 16, %s607, %s598
    %s610 = scalar_lea.vmem %s8, %s594
    %s611 = scalar_lea.vmem [#allocation3], 7
    %s612 = scalar_lea.sflag [#allocation4], 15
    %p614 = scmp.lt.u32.totalorder 1, 8
    %p615 = pneg %p614
    // Predicated region
    $region280: #{music_encoder_forward.1} parent=1 // pred_check
      _
    $region281: #{music_encoder_forward.1} parent=1 // pred_check_branch
      %617 = sbr.rel (%p614) target = $region283
    $region282: #{music_encoder_forward.1} parent=1 // pred_region
      %s632 = sand.u32 1, 7
      %p633 = scmp.eq.s32.totalorder %s632, 0
      %p634 = pneg %p633
      // Predicated region
      $region295: #{music_encoder_forward.1} parent=282 // pred_check
        _
      $region296: #{music_encoder_forward.1} parent=282 // pred_check_branch
        %636 = sbr.rel (%p633) target = $region298
      $region297: #{music_encoder_forward.1} parent=282 // pred_region
        %s637 = sand.u32 1, 7
        %s638 = ssub.s32 1, %s637
        %s639 = scalar_lea.vmem %s610, %s638
        %s640 = ssub.s32 1, %s637
        %s641 = scalar_lea.vmem %s611, %s640 [#allocation3]
        %s642 = sshllo.u32 0, %s637
        loop: start=0, step=1, limit=1
        $region299: #{music_encoder_forward.1} parent=297 // loop_pre_header
          _
        $region300: #{music_encoder_forward.1} parent=297 // loop_header
          %s644 = sphi 0, %s648
          %p645 = scmp.ge.s32.totalorder %s644, 1
          %s649 = sphi %s639, %s639
          %s650 = sphi %s641, %s641
        $region301: #{music_encoder_forward.1} parent=297 // loop_header_branch
          %647 = sbr.rel (%p645) target = $region305
        $region302: #{music_encoder_forward.1} parent=297 // loop_body
          %v651 = vld [vmem:[%s649] sm:%s642]
          %652 = vst [vmem:[%s650] sm:%s642] %v651
        $region303: #{music_encoder_forward.1} parent=297 // loop_footer
          %s648 = sadd.s32 1, %s644
        $region304: #{music_encoder_forward.1} parent=297 // loop_footer_branch
          %643 = sbr.rel target = $region300
        $region305: #{music_encoder_forward.1} parent=297 // loop_exit
          _
      $region298: #{music_encoder_forward.1} parent=282 // pred_fallthru
        _
    $region283: #{music_encoder_forward.1} parent=1 // pred_fallthru
      _
    // Predicated region
    $region284: #{music_encoder_forward.1} parent=1 // pred_check
      %p618 = pneg %p614
    $region285: #{music_encoder_forward.1} parent=1 // pred_check_branch
      %620 = sbr.rel (%p618) target = $region287
    $region286: #{music_encoder_forward.1} parent=1 // pred_region
      %s621 = sshllo.u32 0, 1
      loop: start=0, step=1, limit=1
      $region288: #{music_encoder_forward.1} parent=286 // loop_pre_header
        _
      $region289: #{music_encoder_forward.1} parent=286 // loop_header
        %s623 = sphi 0, %s627
        %p624 = scmp.ge.s32.totalorder %s623, 1
        %s628 = sphi %s610, %s610
        %s629 = sphi %s611, %s611
      $region290: #{music_encoder_forward.1} parent=286 // loop_header_branch
        %626 = sbr.rel (%p624) target = $region294
      $region291: #{music_encoder_forward.1} parent=286 // loop_body
        %v630 = vld [vmem:[%s628] sm:%s621]
        %631 = vst [vmem:[%s629] sm:%s621] %v630
      $region292: #{music_encoder_forward.1} parent=286 // loop_footer
        %s627 = sadd.s32 1, %s623
      $region293: #{music_encoder_forward.1} parent=286 // loop_footer_branch
        %622 = sbr.rel target = $region289
      $region294: #{music_encoder_forward.1} parent=286 // loop_exit
        _
    $region287: #{music_encoder_forward.1} parent=1 // pred_fallthru
      _
    // Predicated region
    $region306: #{music_encoder_forward.1} parent=1 // pred_check
      _
    $region307: #{music_encoder_forward.1} parent=1 // pred_check_branch
      %655 = sbr.rel (0) target = $region309
    $region308: #{music_encoder_forward.1} parent=1 // pred_region
      %656 = vsyncadd %s612, 16
    $region309: #{music_encoder_forward.1} parent=1 // pred_fallthru
      _
    %v657 = vld [vmem:[#allocation8] sm:$0xff]
    %vm658 = vcmask 130048
    %v659 = vsel %vm658, %v657, 0.0
    %v660 = vrot.slane %v659, 4
    %v661 = vadd.f32 %v659, %v660
    %v662 = vrot.slane %v661, 2
    %v663 = vadd.f32 %v661, %v662
    %v664 = vrot.slane %v663, 1
    %v665 = vadd.f32 %v663, %v664
    %v666 = vrcp.pop 8.0
    %v667 = vmul.f32 %v665, %v666
    %v668 = vsub.f32 %v657, %v667
    %v669 = vmul.f32 %v668, %v668
    %v670 = vsel %vm658, %v669, 0.0
    %v671 = vrot.slane %v670, 4
    %v672 = vadd.f32 %v670, %v671
    %v673 = vrot.slane %v672, 2
    %v674 = vadd.f32 %v672, %v673
    %v675 = vrot.slane %v674, 1
    %v676 = vadd.f32 %v674, %v675
    %v677 = vmul.f32 %v676, %v666
    %v678 = vld [vmem:[%s3] sm:$0x1]
    %v679 = vadd.f32 %v677, 1e-05
    %v680 = vrsqrt.pop %v679
    %v681 = vmul.f32 %v678, %v680
    %v683 = vlaneseq
    %v684 = vshrl.u32 %v683, 7
    %v685 = vsub.s32 0, %v684
    %v686 = vrot.slane %v681, %v685
    %v688 = vmul.f32 %v668, %v686
    %v689 = vld [vmem:[#allocation11] sm:$0x1]
    %v691 = vlaneseq
    %v692 = vshrl.u32 %v691, 7
    %v693 = vsub.s32 0, %v692
    %v694 = vrot.slane %v689, %v693
    %v696 = vadd.f32 %v688, %v694
    %v697 = vld [vmem:[#allocation13] sm:$0xff]
    %v698 = vld [vmem:[#allocation13 + $0x8] sm:$0xff]
    %v699 = vld [vmem:[#allocation14] sm:$0x1]
    %v701 = vlaneseq
    %v702 = vshrl.u32 %v701, 7
    %v703 = vsub.s32 0, %v702
    %v704 = vrot.slane %v699, %v703
    %v707 = vsel %vm658, %v696, 0
    %709 = vmatprep.subr.mxu0 0.0
    %710 = vmatpush1.msra.mxu0 %v697
    %711 = vmatprep.subr.mxu0 0.0
    %712 = vmatpush1.msra.mxu0 %v698
    %713 = vmatprep.subr.mxu0 0.0
    %714 = vmatpush1.msra.mxu0 0.0
    %715 = vmatprep.subr.mxu0 0.0
    %716 = vmatpush1.msra.mxu0 0.0
    %717 = vmatprep.subr.mxu0 0.0
    %718 = vmatpush1.msra.mxu0 0.0
    %719 = vmatprep.subr.mxu0 0.0
    %720 = vmatpush1.msra.mxu0 0.0
    %721 = vmatprep.subr.mxu0 0.0
    %722 = vmatpush1.msra.mxu0 0.0
    %723 = vmatprep.subr.mxu0 0.0
    %724 = vmatpush1.msra.mxu0 0.0
    %725 = vmatprep.subr.mxu0 0.0
    %726 = vmatpush1.msra.mxu0 0.0
    %727 = vmatprep.subr.mxu0 0.0
    %728 = vmatpush1.msra.mxu0 0.0
    %729 = vmatprep.subr.mxu0 0.0
    %730 = vmatpush1.msra.mxu0 0.0
    %731 = vmatprep.subr.mxu0 0.0
    %732 = vmatpush1.msra.mxu0 0.0
    %733 = vmatprep.subr.mxu0 0.0
    %734 = vmatpush1.msra.mxu0 0.0
    %735 = vmatprep.subr.mxu0 0.0
    %736 = vmatpush1.msra.mxu0 0.0
    %737 = vmatprep.subr.mxu0 0.0
    %738 = vmatpush1.msra.mxu0 0.0
    %739 = vmatprep.subr.mxu0 0.0
    %740 = vmatpush1.msra.mxu0 0.0
    %741 = vmatprep.subr.mxu0 0.0
    %742 = vmatpush1.msra.mxu0 0.0
    %743 = vmatprep.subr.mxu0 0.0
    %744 = vmatpush1.msra.mxu0 0.0
    %745 = vmatprep.subr.mxu0 0.0
    %746 = vmatpush1.msra.mxu0 0.0
    %747 = vmatprep.subr.mxu0 0.0
    %748 = vmatpush1.msra.mxu0 0.0
    %749 = vmatprep.subr.mxu0 0.0
    %750 = vmatpush1.msra.mxu0 0.0
    %751 = vmatprep.subr.mxu0 0.0
    %752 = vmatpush1.msra.mxu0 0.0
    %753 = vmatprep.subr.mxu0 0.0
    %754 = vmatpush1.msra.mxu0 0.0
    %755 = vmatprep.subr.mxu0 0.0
    %756 = vmatpush1.msra.mxu0 0.0
    %757 = vmatprep.subr.mxu0 0.0
    %758 = vmatpush1.msra.mxu0 0.0
    %759 = vmatprep.subr.mxu0 0.0
    %760 = vmatpush1.msra.mxu0 0.0
    %761 = vmatprep.subr.mxu0 0.0
    %762 = vmatpush1.msra.mxu0 0.0
    %763 = vmatprep.subr.mxu0 0.0
    %764 = vmatpush1.msra.mxu0 0.0
    %765 = vmatprep.subr.mxu0 0.0
    %766 = vmatpush1.msra.mxu0 0.0
    %767 = vmatprep.subr.mxu0 0.0
    %768 = vmatpush1.msra.mxu0 0.0
    %769 = vmatprep.subr.mxu0 0.0
    %770 = vmatpush1.msra.mxu0 0.0
    %771 = vmatprep.subr.mxu0 0.0
    %772 = vmatpush1.msra.mxu0 0.0
    %773 = vmatprep.mubr.f32.mxu0 0.0
    %774 = vmatmul.mubr.f32.gmra.mrb[0].mxu0 %v707
    %v775 = vpop.f32.mrb[0].mxu0
    %v776 = vadd.f32 %v704, %v775
    %v777 = vpop.f32.mrb[0].mxu0
    %778 = vdwg.mxu0
    %s779 = smul.u32 1, 1
    %s780 = sshll.u32 %s779, 4
    %781 = dma.done [#allocation4], %s780
    %s782 = sshll.u32 %s779, 4
    %783 = dma.done %s108, %s782
    %s784 = sshll.u32 %s779, 4
    %785 = dma.done %s166, %s784
    %s786 = sshll.u32 %s779, 4
    %787 = dma.done %s180, %s786
    %s788 = sshll.u32 %s779, 4
    %789 = dma.done %s238, %s788
    %s790 = sshll.u32 %s779, 4
    %791 = dma.done %s252, %s790
    %s792 = sshll.u32 %s779, 4
    %793 = dma.done %s310, %s792
    %s794 = sshll.u32 %s779, 4
    %795 = dma.done %s324, %s794
    %s796 = sshll.u32 %s779, 4
    %797 = dma.done %s382, %s796
    %s798 = sshll.u32 %s779, 4
    %799 = dma.done %s396, %s798
    %s800 = sshll.u32 %s779, 4
    %801 = dma.done %s454, %s800
    %s802 = sshll.u32 %s779, 4
    %803 = dma.done %s468, %s802
    %s804 = sshll.u32 %s779, 4
    %805 = dma.done %s526, %s804
    %s806 = sshll.u32 %s779, 4
    %807 = dma.done %s540, %s806
    %s808 = sshll.u32 %s779, 4
    %809 = dma.done %s598, %s808
    %s810 = sshll.u32 %s779, 4
    %811 = dma.done %s612, %s810
    %v812 = vld [vmem:[#allocation2] sm:$0xff]
    %v813 = vadd.f32 %v776, %v812
    %v814 = vld [vmem:[#allocation3] sm:$0xff]
    %v815 = vadd.f32 %v813, %v814
    %816 = vst [vmem:[#allocation16] sm:$0xff] %v815
    // Predicated region
    $region310: #{music_encoder_forward.1} parent=1 // pred_check
      _
    $region311: #{music_encoder_forward.1} parent=1 // pred_check_branch
      %818 = sbr.rel (0) target = $region313
    $region312: #{music_encoder_forward.1} parent=1 // pred_region
      %s820 = ssub.s32 128, 128
      %821 = vsyncadd [#allocation10], %s820
      %s823 = sshll.u32 [#allocation16], 4
      %s824 = int_to_ptr.vmem [resolvable:$true] %s823
      %826 = dma.vmem_to_hbm [thread:$0]  %s824, 128, %s9, [#allocation10]
    $region313: #{music_encoder_forward.1} parent=1 // pred_fallthru
      _
    // Predicated region
    $region314: #{music_encoder_forward.1} parent=1 // pred_check
      _
    $region315: #{music_encoder_forward.1} parent=1 // pred_check_branch
      %828 = sbr.rel (0) target = $region317
    $region316: #{music_encoder_forward.1} parent=1 // pred_region
      %829 = dma.done [#allocation10], 128
    $region317: #{music_encoder_forward.1} parent=1 // pred_fallthru
      _
    %830 = vsyncpa [#allocation9], 1
    %831 = vsyncpa [#allocation12], 1
    %832 = vsyncpa [#allocation15], 1
    %833 = vsyncpa [#allocation10], 1
  %834 = vsyncmov [#allocation4]
  %s835 = vpop.sfrf %834
  %p836 = scmp.eq.s32.totalorder %s835, 0
  %p837 = pneg %p836
  %839 = shalt.err (%p837)
  %s840 = scalar_lea.sflag [#allocation4], 1
  %841 = vsyncmov %s840
  %s842 = vpop.sfrf %841
  %p843 = scmp.eq.s32.totalorder %s842, 0
  %p844 = pneg %p843
  %846 = shalt.err (%p844)
  %s847 = scalar_lea.sflag [#allocation4], 2
  %848 = vsyncmov %s847
  %s849 = vpop.sfrf %848
  %p850 = scmp.eq.s32.totalorder %s849, 0
  %p851 = pneg %p850
  %853 = shalt.err (%p851)
  %s854 = scalar_lea.sflag [#allocation4], 3
  %855 = vsyncmov %s854
  %s856 = vpop.sfrf %855
  %p857 = scmp.eq.s32.totalorder %s856, 0
  %p858 = pneg %p857
  %860 = shalt.err (%p858)
  %s861 = scalar_lea.sflag [#allocation4], 4
  %862 = vsyncmov %s861
  %s863 = vpop.sfrf %862
  %p864 = scmp.eq.s32.totalorder %s863, 0
  %p865 = pneg %p864
  %867 = shalt.err (%p865)
  %s868 = scalar_lea.sflag [#allocation4], 5
  %869 = vsyncmov %s868
  %s870 = vpop.sfrf %869
  %p871 = scmp.eq.s32.totalorder %s870, 0
  %p872 = pneg %p871
  %874 = shalt.err (%p872)
  %s875 = scalar_lea.sflag [#allocation4], 6
  %876 = vsyncmov %s875
  %s877 = vpop.sfrf %876
  %p878 = scmp.eq.s32.totalorder %s877, 0
  %p879 = pneg %p878
  %881 = shalt.err (%p879)
  %s882 = scalar_lea.sflag [#allocation4], 7
  %883 = vsyncmov %s882
  %s884 = vpop.sfrf %883
  %p885 = scmp.eq.s32.totalorder %s884, 0
  %p886 = pneg %p885
  %888 = shalt.err (%p886)
  %s889 = scalar_lea.sflag [#allocation4], 8
  %890 = vsyncmov %s889
  %s891 = vpop.sfrf %890
  %p892 = scmp.eq.s32.totalorder %s891, 0
  %p893 = pneg %p892
  %895 = shalt.err (%p893)
  %s896 = scalar_lea.sflag [#allocation4], 9
  %897 = vsyncmov %s896
  %s898 = vpop.sfrf %897
  %p899 = scmp.eq.s32.totalorder %s898, 0
  %p900 = pneg %p899
  %902 = shalt.err (%p900)
  %s903 = scalar_lea.sflag [#allocation4], 10
  %904 = vsyncmov %s903
  %s905 = vpop.sfrf %904
  %p906 = scmp.eq.s32.totalorder %s905, 0
  %p907 = pneg %p906
  %909 = shalt.err (%p907)
  %s910 = scalar_lea.sflag [#allocation4], 11
  %911 = vsyncmov %s910
  %s912 = vpop.sfrf %911
  %p913 = scmp.eq.s32.totalorder %s912, 0
  %p914 = pneg %p913
  %916 = shalt.err (%p914)
  %s917 = scalar_lea.sflag [#allocation4], 12
  %918 = vsyncmov %s917
  %s919 = vpop.sfrf %918
  %p920 = scmp.eq.s32.totalorder %s919, 0
  %p921 = pneg %p920
  %923 = shalt.err (%p921)
  %s924 = scalar_lea.sflag [#allocation4], 13
  %925 = vsyncmov %s924
  %s926 = vpop.sfrf %925
  %p927 = scmp.eq.s32.totalorder %s926, 0
  %p928 = pneg %p927
  %930 = shalt.err (%p928)
  %s931 = scalar_lea.sflag [#allocation4], 14
  %932 = vsyncmov %s931
  %s933 = vpop.sfrf %932
  %p934 = scmp.eq.s32.totalorder %s933, 0
  %p935 = pneg %p934
  %937 = shalt.err (%p935)
  %s938 = scalar_lea.sflag [#allocation4], 15
  %939 = vsyncmov %s938
  %s940 = vpop.sfrf %939
  %p941 = scmp.eq.s32.totalorder %s940, 0
  %p942 = pneg %p941
  %944 = shalt.err (%p942)

</llo_original>
